<compile_context>
chip_gen: v7x
topology: tpu7x:2x2x1
jax: 0.10.0
libtpu: 0.0.40
codegen_flags: <defaults>
</compile_context>

<pallas_src>
import functools
import math

import jax
import jax.numpy as jnp
from jax.experimental import pallas as pl
from jax.experimental.pallas import tpu as pltpu


def _round_up(x, m):
    return ((x + m - 1) // m) * m


# ----------------------------------------------------------------------------
# Pallas kernel: fused (folded-BN conv) + ReLU + fc + negate for one batch tile
# ----------------------------------------------------------------------------
def _convkb_kernel(aw_ref, bc_ref, fcw_ref, h_ref, r_ref, t_ref, o_ref, *,
                   out_channels, kernel_size):
    # aw_ref : SMEM (kernel_size*3, C)  folded conv*BN weights, index [dh*3 + w, c]
    # bc_ref : SMEM (C,)                folded per-channel bias
    # fcw_ref: VMEM (C, Dp)             fc weights reshaped per (channel, position)
    # h/r/t  : VMEM (TB, D)             gathered embeddings for this batch tile
    # o_ref  : VMEM (TB, 1)             output scores (negated, as in the module)
    h = h_ref[...].astype(jnp.float32)
    r = r_ref[...].astype(jnp.float32)
    t = t_ref[...].astype(jnp.float32)
    xs = (h, r, t)

    tb, d = h.shape
    dp = d - kernel_size + 1
    fcw = fcw_ref[...]                                      # (C, Dp), loaded once

    acc = jnp.zeros((tb, dp), dtype=jnp.float32)
    for c in range(out_channels):                           # static unroll (C is small)
        p = None
        for dh in range(kernel_size):
            for w in range(3):
                xw = xs[w]
                xsl = xw if kernel_size == 1 else xw[:, dh:dh + dp]
                term = aw_ref[dh * 3 + w, c] * xsl          # SMEM scalar * (TB, Dp)
                p = term if p is None else p + term
        p = p + bc_ref[c]                                   # folded conv bias + BN
        u = jnp.maximum(p, 0.0)                             # ReLU
        acc = acc + u * fcw[c][None, :]                     # weight by fc row c

    # score = -(fc output); reduce over the flattened (channel, position) axis.
    score = -jnp.sum(acc, axis=-1, keepdims=True)           # (TB, 1)
    o_ref[...] = score.astype(o_ref.dtype)


# ----------------------------------------------------------------------------
# Wrapper: gather embeddings, fold BN/conv params, tile the batch, call Pallas
# ----------------------------------------------------------------------------
def convkb_forward_pallas(params, h_idx, r_idx, t_idx, *, out_channels, kernel_size,
                          bn_eps=1e-5, batch_tile=256):
    ent = params['ent_embedding']
    rel = params['rel_embedding']
    D = ent.shape[1]
    Dp = D - kernel_size + 1
    C = out_channels

    # Embedding lookups (torch nn.Embedding) -- plain JAX glue.
    h = jnp.take(ent, h_idx, axis=0).astype(jnp.float32)    # (B, D)
    r = jnp.take(rel, r_idx, axis=0).astype(jnp.float32)
    t = jnp.take(ent, t_idx, axis=0).astype(jnp.float32)

    # ---- Fold BN1 (single-channel affine) + Conv2d + BN2 into per-channel affine ----
    a1 = params['bn1_gamma'][0] * jax.lax.rsqrt(params['bn1_var'][0] + bn_eps)
    b1 = params['bn1_beta'][0] - params['bn1_mean'][0] * a1
    a2 = params['bn2_gamma'] * jax.lax.rsqrt(params['bn2_var'] + bn_eps)      # (C,)
    b2 = params['bn2_beta'] - params['bn2_mean'] * a2                          # (C,)

    W = params['conv_weight'][:, 0, :, :]                    # (C, k, 3)
    A = (a2[:, None, None] * a1) * W                         # (C, k, 3)
    Bc = a2 * (b1 * jnp.sum(W, axis=(1, 2)) + params['conv_bias']) + b2        # (C,)

    aw = jnp.transpose(A, (1, 2, 0)).reshape(kernel_size * 3, C)   # [(dh,w), c]
    fcw = params['fc_weight'].reshape(C, Dp)                 # torch view order: c*Dp + d

    # ---- Batch tiling (sublane-dense tiles, multiple of 8) ----
    B = h.shape[0]
    TB = min(batch_tile, _round_up(B, 8))
    TB = max(8, _round_up(TB, 8))
    B_pad = _round_up(B, TB)
    if B_pad != B:
        pad = ((0, B_pad - B), (0, 0))
        h = jnp.pad(h, pad)
        r = jnp.pad(r, pad)
        t = jnp.pad(t, pad)

    kernel = functools.partial(_convkb_kernel, out_channels=C, kernel_size=kernel_size)

    out = pl.pallas_call(
        kernel,
        out_shape=jax.ShapeDtypeStruct((B_pad, 1), jnp.float32),
        grid=(B_pad // TB,),
        in_specs=[
            pl.BlockSpec(memory_space=pltpu.MemorySpace.SMEM),   # aw: folded weights
            pl.BlockSpec(memory_space=pltpu.MemorySpace.SMEM),   # bc: folded bias
            pl.BlockSpec((C, Dp), lambda i: (0, 0)),             # fcw: VMEM-resident
            pl.BlockSpec((TB, D), lambda i: (i, 0)),             # h tile
            pl.BlockSpec((TB, D), lambda i: (i, 0)),             # r tile
            pl.BlockSpec((TB, D), lambda i: (i, 0)),             # t tile
        ],
        out_specs=pl.BlockSpec((TB, 1), lambda i: (i, 0)),
        compiler_params=pltpu.CompilerParams(dimension_semantics=("parallel",)),
    )(aw, Bc, fcw, h, r, t)

    return out[:B, 0]                                        # (B,)


# ----------------------------------------------------------------------------
# Pure-JAX reference (mirrors the PyTorch module in eval mode)
# ----------------------------------------------------------------------------
def convkb_forward_reference(params, h_idx, r_idx, t_idx, *, out_channels, kernel_size,
                             bn_eps=1e-5):
    ent = params['ent_embedding']
    rel = params['rel_embedding']
    h = jnp.take(ent, h_idx, axis=0)
    r = jnp.take(rel, r_idx, axis=0)
    t = jnp.take(ent, t_idx, axis=0)
    B, D = h.shape
    Dp = D - kernel_size + 1

    x = jnp.stack([h, r, t], axis=1)                         # (B, 3, D)
    x = jnp.transpose(x, (0, 2, 1))[:, None, :, :]           # (B, 1, D, 3)

    a1 = params['bn1_gamma'] / jnp.sqrt(params['bn1_var'] + bn_eps)
    x = (x - params['bn1_mean'][None, :, None, None]) * a1[None, :, None, None] \
        + params['bn1_beta'][None, :, None, None]

    y = jax.lax.conv_general_dilated(
        x, params['conv_weight'], window_strides=(1, 1), padding='VALID',
        dimension_numbers=('NCHW', 'OIHW', 'NCHW'),
        precision=jax.lax.Precision.HIGHEST)                 # (B, C, Dp, 1)
    y = y + params['conv_bias'][None, :, None, None]

    a2 = params['bn2_gamma'] / jnp.sqrt(params['bn2_var'] + bn_eps)
    y = (y - params['bn2_mean'][None, :, None, None]) * a2[None, :, None, None] \
        + params['bn2_beta'][None, :, None, None]
    y = jnp.maximum(y, 0.0)

    y = y.reshape(B, out_channels * Dp)                      # same order as torch .view
    score = jnp.dot(y, params['fc_weight'].reshape(-1),
                    precision=jax.lax.Precision.HIGHEST)     # Linear, no bias
    return -score


# ----------------------------------------------------------------------------
# Deterministic parameter init (xavier-style, plus non-trivial BN stats)
# ----------------------------------------------------------------------------
def init_convkb_params(key, nentity, nrelation, hidden_dim, out_channels, kernel_size):
    D = hidden_dim
    Dp = D - kernel_size + 1
    ks = jax.random.split(key, 13)

    def xavier(k, shape, fan_in, fan_out):
        bound = math.sqrt(6.0 / (fan_in + fan_out))
        return jax.random.uniform(k, shape, minval=-bound, maxval=bound, dtype=jnp.float32)

    return dict(
        ent_embedding=xavier(ks[0], (nentity, D), nentity, D),
        rel_embedding=xavier(ks[1], (nrelation, D), nrelation, D),
        conv_weight=xavier(ks[2], (out_channels, 1, kernel_size, 3), kernel_size * 3, out_channels),
        conv_bias=0.1 * jax.random.normal(ks[3], (out_channels,), dtype=jnp.float32),
        fc_weight=xavier(ks[4], (1, out_channels * Dp), out_channels * Dp, 1),
        bn1_gamma=1.0 + 0.1 * jax.random.normal(ks[5], (1,), dtype=jnp.float32),
        bn1_beta=0.1 * jax.random.normal(ks[6], (1,), dtype=jnp.float32),
        bn1_mean=0.05 * jax.random.normal(ks[7], (1,), dtype=jnp.float32),
        bn1_var=jnp.abs(1.0 + 0.1 * jax.random.normal(ks[8], (1,), dtype=jnp.float32)),
        bn2_gamma=1.0 + 0.1 * jax.random.normal(ks[9], (out_channels,), dtype=jnp.float32),
        bn2_beta=0.1 * jax.random.normal(ks[10], (out_channels,), dtype=jnp.float32),
        bn2_mean=0.05 * jax.random.normal(ks[11], (out_channels,), dtype=jnp.float32),
        bn2_var=jnp.abs(1.0 + 0.1 * jax.random.normal(ks[12], (out_channels,), dtype=jnp.float32)),
    )


# ----------------------------------------------------------------------------
# Demo / self-test
# ----------------------------------------------------------------------------
if __name__ == "__main__":
    key = jax.random.PRNGKey(0)
    nentity, nrelation, hidden_dim = 64, 16, 32
    B = 12

    k_param, k_h, k_r, k_t = jax.random.split(key, 4)
    h_idx = jax.random.randint(k_h, (B,), 0, nentity, dtype=jnp.int32)
    r_idx = jax.random.randint(k_r, (B,), 0, nrelation, dtype=jnp.int32)
    t_idx = jax.random.randint(k_t, (B,), 0, nentity, dtype=jnp.int32)

    # (out_channels, kernel_size): default ConvKB config plus a taller conv kernel.
    configs = [(32, 1), (8, 3)]

    for C, ksz in configs:
        params = init_convkb_params(k_param, nentity, nrelation, hidden_dim, C, ksz)
        fwd = jax.jit(functools.partial(
            convkb_forward_pallas, out_channels=C, kernel_size=ksz, batch_tile=8))
        out = fwd(params, h_idx, r_idx, t_idx)
        jax.block_until_ready(out)
        assert out.shape == (B,), (C, ksz, out.shape)

        ref = convkb_forward_reference(params, h_idx, r_idx, t_idx,
                                       out_channels=C, kernel_size=ksz)
        assert jnp.allclose(out, ref, rtol=5e-4, atol=5e-4), (
            C, ksz, float(jnp.max(jnp.abs(out - ref))))

    print("KERNEL_OK")
</pallas_src>

<mosaic_0001>
module attributes {stable_mosaic.version = 11 : i64} {
  func.func @_convkb_kernel(%arg0: i32, %arg1: memref<3x32xf32, #tpu.memory_space<smem>>, %arg2: memref<32xf32, #tpu.memory_space<smem>>, %arg3: memref<32x32xf32, #tpu.memory_space<vmem>>, %arg4: memref<8x32xf32, #tpu.memory_space<vmem>>, %arg5: memref<8x32xf32, #tpu.memory_space<vmem>>, %arg6: memref<8x32xf32, #tpu.memory_space<vmem>>, %arg7: memref<8x1xf32, #tpu.memory_space<vmem>>) attributes {dimension_semantics = [#tpu.dimension_semantics<parallel>], iteration_bounds = array<i64: 2>, scalar_prefetch = 0 : i64, scratch_operands = 0 : i64, tpu.core_type = #tpu.core_type<tc>, window_params = [{transform_indices = @transform_0, window_bounds = array<i64: 3, 32>}, {transform_indices = @transform_1, window_bounds = array<i64: 32>}, {pipeline_mode = #tpu.pipeline_mode<synchronous>, transform_indices = @transform_2, window_bounds = array<i64: 32, 32>}, {transform_indices = @transform_3, window_bounds = array<i64: 8, 32>}, {transform_indices = @transform_4, window_bounds = array<i64: 8, 32>}, {transform_indices = @transform_5, window_bounds = array<i64: 8, 32>}, {transform_indices = @transform_6, window_bounds = array<i64: 8, 1>}]} {
    %c0 = arith.constant 0 : index
    %c0_0 = arith.constant 0 : index
    %0 = vector.load %arg4[%c0, %c0_0] : memref<8x32xf32, #tpu.memory_space<vmem>>, vector<8x32xf32>
    %c0_1 = arith.constant 0 : index
    %c0_2 = arith.constant 0 : index
    %1 = vector.load %arg5[%c0_1, %c0_2] : memref<8x32xf32, #tpu.memory_space<vmem>>, vector<8x32xf32>
    %c0_3 = arith.constant 0 : index
    %c0_4 = arith.constant 0 : index
    %2 = vector.load %arg6[%c0_3, %c0_4] : memref<8x32xf32, #tpu.memory_space<vmem>>, vector<8x32xf32>
    %c0_5 = arith.constant 0 : index
    %c0_6 = arith.constant 0 : index
    %3 = vector.load %arg3[%c0_5, %c0_6] : memref<32x32xf32, #tpu.memory_space<vmem>>, vector<32x32xf32>
    %cst = arith.constant 0.000000e+00 : f32
    %4 = vector.broadcast %cst : f32 to vector<8x32xf32>
    %c0_7 = arith.constant 0 : index
    %c0_8 = arith.constant 0 : index
    %5 = memref.load %arg1[%c0_7, %c0_8] : memref<3x32xf32, #tpu.memory_space<smem>>
    %6 = vector.broadcast %5 : f32 to vector<8x32xf32>
    %7 = arith.mulf %6, %0 : vector<8x32xf32>
    %c1 = arith.constant 1 : index
    %c0_9 = arith.constant 0 : index
    %8 = memref.load %arg1[%c1, %c0_9] : memref<3x32xf32, #tpu.memory_space<smem>>
    %9 = vector.broadcast %8 : f32 to vector<8x32xf32>
    %10 = arith.mulf %9, %1 : vector<8x32xf32>
    %11 = arith.addf %7, %10 : vector<8x32xf32>
    %c2 = arith.constant 2 : index
    %c0_10 = arith.constant 0 : index
    %12 = memref.load %arg1[%c2, %c0_10] : memref<3x32xf32, #tpu.memory_space<smem>>
    %13 = vector.broadcast %12 : f32 to vector<8x32xf32>
    %14 = arith.mulf %13, %2 : vector<8x32xf32>
    %15 = arith.addf %11, %14 : vector<8x32xf32>
    %c0_11 = arith.constant 0 : index
    %16 = memref.load %arg2[%c0_11] : memref<32xf32, #tpu.memory_space<smem>>
    %17 = vector.broadcast %16 : f32 to vector<8x32xf32>
    %18 = arith.addf %15, %17 : vector<8x32xf32>
    %cst_12 = arith.constant 0.000000e+00 : f32
    %19 = vector.broadcast %cst_12 : f32 to vector<8x32xf32>
    %20 = arith.maximumf %18, %19 : vector<8x32xf32>
    %21 = vector.extract_strided_slice %3 {offsets = [0, 0], sizes = [1, 32], strides = [1, 1]} : vector<32x32xf32> to vector<1x32xf32>
    %22 = vector.shape_cast %21 : vector<1x32xf32> to vector<32xf32>
    %23 = vector.shape_cast %22 : vector<32xf32> to vector<1x32xf32>
    %24 = vector.broadcast %23 : vector<1x32xf32> to vector<8x32xf32>
    %25 = arith.mulf %20, %24 : vector<8x32xf32>
    %26 = arith.addf %4, %25 : vector<8x32xf32>
    %c0_13 = arith.constant 0 : index
    %c1_14 = arith.constant 1 : index
    %27 = memref.load %arg1[%c0_13, %c1_14] : memref<3x32xf32, #tpu.memory_space<smem>>
    %28 = vector.broadcast %27 : f32 to vector<8x32xf32>
    %29 = arith.mulf %28, %0 : vector<8x32xf32>
    %c1_15 = arith.constant 1 : index
    %c1_16 = arith.constant 1 : index
    %30 = memref.load %arg1[%c1_15, %c1_16] : memref<3x32xf32, #tpu.memory_space<smem>>
    %31 = vector.broadcast %30 : f32 to vector<8x32xf32>
    %32 = arith.mulf %31, %1 : vector<8x32xf32>
    %33 = arith.addf %29, %32 : vector<8x32xf32>
    %c2_17 = arith.constant 2 : index
    %c1_18 = arith.constant 1 : index
    %34 = memref.load %arg1[%c2_17, %c1_18] : memref<3x32xf32, #tpu.memory_space<smem>>
    %35 = vector.broadcast %34 : f32 to vector<8x32xf32>
    %36 = arith.mulf %35, %2 : vector<8x32xf32>
    %37 = arith.addf %33, %36 : vector<8x32xf32>
    %c1_19 = arith.constant 1 : index
    %38 = memref.load %arg2[%c1_19] : memref<32xf32, #tpu.memory_space<smem>>
    %39 = vector.broadcast %38 : f32 to vector<8x32xf32>
    %40 = arith.addf %37, %39 : vector<8x32xf32>
    %cst_20 = arith.constant 0.000000e+00 : f32
    %41 = vector.broadcast %cst_20 : f32 to vector<8x32xf32>
    %42 = arith.maximumf %40, %41 : vector<8x32xf32>
    %43 = vector.extract_strided_slice %3 {offsets = [1, 0], sizes = [1, 32], strides = [1, 1]} : vector<32x32xf32> to vector<1x32xf32>
    %44 = vector.shape_cast %43 : vector<1x32xf32> to vector<32xf32>
    %45 = vector.shape_cast %44 : vector<32xf32> to vector<1x32xf32>
    %46 = vector.broadcast %45 : vector<1x32xf32> to vector<8x32xf32>
    %47 = arith.mulf %42, %46 : vector<8x32xf32>
    %48 = arith.addf %26, %47 : vector<8x32xf32>
    %c0_21 = arith.constant 0 : index
    %c2_22 = arith.constant 2 : index
    %49 = memref.load %arg1[%c0_21, %c2_22] : memref<3x32xf32, #tpu.memory_space<smem>>
    %50 = vector.broadcast %49 : f32 to vector<8x32xf32>
    %51 = arith.mulf %50, %0 : vector<8x32xf32>
    %c1_23 = arith.constant 1 : index
    %c2_24 = arith.constant 2 : index
    %52 = memref.load %arg1[%c1_23, %c2_24] : memref<3x32xf32, #tpu.memory_space<smem>>
    %53 = vector.broadcast %52 : f32 to vector<8x32xf32>
    %54 = arith.mulf %53, %1 : vector<8x32xf32>
    %55 = arith.addf %51, %54 : vector<8x32xf32>
    %c2_25 = arith.constant 2 : index
    %c2_26 = arith.constant 2 : index
    %56 = memref.load %arg1[%c2_25, %c2_26] : memref<3x32xf32, #tpu.memory_space<smem>>
    %57 = vector.broadcast %56 : f32 to vector<8x32xf32>
    %58 = arith.mulf %57, %2 : vector<8x32xf32>
    %59 = arith.addf %55, %58 : vector<8x32xf32>
    %c2_27 = arith.constant 2 : index
    %60 = memref.load %arg2[%c2_27] : memref<32xf32, #tpu.memory_space<smem>>
    %61 = vector.broadcast %60 : f32 to vector<8x32xf32>
    %62 = arith.addf %59, %61 : vector<8x32xf32>
    %cst_28 = arith.constant 0.000000e+00 : f32
    %63 = vector.broadcast %cst_28 : f32 to vector<8x32xf32>
    %64 = arith.maximumf %62, %63 : vector<8x32xf32>
    %65 = vector.extract_strided_slice %3 {offsets = [2, 0], sizes = [1, 32], strides = [1, 1]} : vector<32x32xf32> to vector<1x32xf32>
    %66 = vector.shape_cast %65 : vector<1x32xf32> to vector<32xf32>
    %67 = vector.shape_cast %66 : vector<32xf32> to vector<1x32xf32>
    %68 = vector.broadcast %67 : vector<1x32xf32> to vector<8x32xf32>
    %69 = arith.mulf %64, %68 : vector<8x32xf32>
    %70 = arith.addf %48, %69 : vector<8x32xf32>
    %c0_29 = arith.constant 0 : index
    %c3 = arith.constant 3 : index
    %71 = memref.load %arg1[%c0_29, %c3] : memref<3x32xf32, #tpu.memory_space<smem>>
    %72 = vector.broadcast %71 : f32 to vector<8x32xf32>
    %73 = arith.mulf %72, %0 : vector<8x32xf32>
    %c1_30 = arith.constant 1 : index
    %c3_31 = arith.constant 3 : index
    %74 = memref.load %arg1[%c1_30, %c3_31] : memref<3x32xf32, #tpu.memory_space<smem>>
    %75 = vector.broadcast %74 : f32 to vector<8x32xf32>
    %76 = arith.mulf %75, %1 : vector<8x32xf32>
    %77 = arith.addf %73, %76 : vector<8x32xf32>
    %c2_32 = arith.constant 2 : index
    %c3_33 = arith.constant 3 : index
    %78 = memref.load %arg1[%c2_32, %c3_33] : memref<3x32xf32, #tpu.memory_space<smem>>
    %79 = vector.broadcast %78 : f32 to vector<8x32xf32>
    %80 = arith.mulf %79, %2 : vector<8x32xf32>
    %81 = arith.addf %77, %80 : vector<8x32xf32>
    %c3_34 = arith.constant 3 : index
    %82 = memref.load %arg2[%c3_34] : memref<32xf32, #tpu.memory_space<smem>>
    %83 = vector.broadcast %82 : f32 to vector<8x32xf32>
    %84 = arith.addf %81, %83 : vector<8x32xf32>
    %cst_35 = arith.constant 0.000000e+00 : f32
    %85 = vector.broadcast %cst_35 : f32 to vector<8x32xf32>
    %86 = arith.maximumf %84, %85 : vector<8x32xf32>
    %87 = vector.extract_strided_slice %3 {offsets = [3, 0], sizes = [1, 32], strides = [1, 1]} : vector<32x32xf32> to vector<1x32xf32>
    %88 = vector.shape_cast %87 : vector<1x32xf32> to vector<32xf32>
    %89 = vector.shape_cast %88 : vector<32xf32> to vector<1x32xf32>
    %90 = vector.broadcast %89 : vector<1x32xf32> to vector<8x32xf32>
    %91 = arith.mulf %86, %90 : vector<8x32xf32>
    %92 = arith.addf %70, %91 : vector<8x32xf32>
    %c0_36 = arith.constant 0 : index
    %c4 = arith.constant 4 : index
    %93 = memref.load %arg1[%c0_36, %c4] : memref<3x32xf32, #tpu.memory_space<smem>>
    %94 = vector.broadcast %93 : f32 to vector<8x32xf32>
    %95 = arith.mulf %94, %0 : vector<8x32xf32>
    %c1_37 = arith.constant 1 : index
    %c4_38 = arith.constant 4 : index
    %96 = memref.load %arg1[%c1_37, %c4_38] : memref<3x32xf32, #tpu.memory_space<smem>>
    %97 = vector.broadcast %96 : f32 to vector<8x32xf32>
    %98 = arith.mulf %97, %1 : vector<8x32xf32>
    %99 = arith.addf %95, %98 : vector<8x32xf32>
    %c2_39 = arith.constant 2 : index
    %c4_40 = arith.constant 4 : index
    %100 = memref.load %arg1[%c2_39, %c4_40] : memref<3x32xf32, #tpu.memory_space<smem>>
    %101 = vector.broadcast %100 : f32 to vector<8x32xf32>
    %102 = arith.mulf %101, %2 : vector<8x32xf32>
    %103 = arith.addf %99, %102 : vector<8x32xf32>
    %c4_41 = arith.constant 4 : index
    %104 = memref.load %arg2[%c4_41] : memref<32xf32, #tpu.memory_space<smem>>
    %105 = vector.broadcast %104 : f32 to vector<8x32xf32>
    %106 = arith.addf %103, %105 : vector<8x32xf32>
    %cst_42 = arith.constant 0.000000e+00 : f32
    %107 = vector.broadcast %cst_42 : f32 to vector<8x32xf32>
    %108 = arith.maximumf %106, %107 : vector<8x32xf32>
    %109 = vector.extract_strided_slice %3 {offsets = [4, 0], sizes = [1, 32], strides = [1, 1]} : vector<32x32xf32> to vector<1x32xf32>
    %110 = vector.shape_cast %109 : vector<1x32xf32> to vector<32xf32>
    %111 = vector.shape_cast %110 : vector<32xf32> to vector<1x32xf32>
    %112 = vector.broadcast %111 : vector<1x32xf32> to vector<8x32xf32>
    %113 = arith.mulf %108, %112 : vector<8x32xf32>
    %114 = arith.addf %92, %113 : vector<8x32xf32>
    %c0_43 = arith.constant 0 : index
    %c5 = arith.constant 5 : index
    %115 = memref.load %arg1[%c0_43, %c5] : memref<3x32xf32, #tpu.memory_space<smem>>
    %116 = vector.broadcast %115 : f32 to vector<8x32xf32>
    %117 = arith.mulf %116, %0 : vector<8x32xf32>
    %c1_44 = arith.constant 1 : index
    %c5_45 = arith.constant 5 : index
    %118 = memref.load %arg1[%c1_44, %c5_45] : memref<3x32xf32, #tpu.memory_space<smem>>
    %119 = vector.broadcast %118 : f32 to vector<8x32xf32>
    %120 = arith.mulf %119, %1 : vector<8x32xf32>
    %121 = arith.addf %117, %120 : vector<8x32xf32>
    %c2_46 = arith.constant 2 : index
    %c5_47 = arith.constant 5 : index
    %122 = memref.load %arg1[%c2_46, %c5_47] : memref<3x32xf32, #tpu.memory_space<smem>>
    %123 = vector.broadcast %122 : f32 to vector<8x32xf32>
    %124 = arith.mulf %123, %2 : vector<8x32xf32>
    %125 = arith.addf %121, %124 : vector<8x32xf32>
    %c5_48 = arith.constant 5 : index
    %126 = memref.load %arg2[%c5_48] : memref<32xf32, #tpu.memory_space<smem>>
    %127 = vector.broadcast %126 : f32 to vector<8x32xf32>
    %128 = arith.addf %125, %127 : vector<8x32xf32>
    %cst_49 = arith.constant 0.000000e+00 : f32
    %129 = vector.broadcast %cst_49 : f32 to vector<8x32xf32>
    %130 = arith.maximumf %128, %129 : vector<8x32xf32>
    %131 = vector.extract_strided_slice %3 {offsets = [5, 0], sizes = [1, 32], strides = [1, 1]} : vector<32x32xf32> to vector<1x32xf32>
    %132 = vector.shape_cast %131 : vector<1x32xf32> to vector<32xf32>
    %133 = vector.shape_cast %132 : vector<32xf32> to vector<1x32xf32>
    %134 = vector.broadcast %133 : vector<1x32xf32> to vector<8x32xf32>
    %135 = arith.mulf %130, %134 : vector<8x32xf32>
    %136 = arith.addf %114, %135 : vector<8x32xf32>
    %c0_50 = arith.constant 0 : index
    %c6 = arith.constant 6 : index
    %137 = memref.load %arg1[%c0_50, %c6] : memref<3x32xf32, #tpu.memory_space<smem>>
    %138 = vector.broadcast %137 : f32 to vector<8x32xf32>
    %139 = arith.mulf %138, %0 : vector<8x32xf32>
    %c1_51 = arith.constant 1 : index
    %c6_52 = arith.constant 6 : index
    %140 = memref.load %arg1[%c1_51, %c6_52] : memref<3x32xf32, #tpu.memory_space<smem>>
    %141 = vector.broadcast %140 : f32 to vector<8x32xf32>
    %142 = arith.mulf %141, %1 : vector<8x32xf32>
    %143 = arith.addf %139, %142 : vector<8x32xf32>
    %c2_53 = arith.constant 2 : index
    %c6_54 = arith.constant 6 : index
    %144 = memref.load %arg1[%c2_53, %c6_54] : memref<3x32xf32, #tpu.memory_space<smem>>
    %145 = vector.broadcast %144 : f32 to vector<8x32xf32>
    %146 = arith.mulf %145, %2 : vector<8x32xf32>
    %147 = arith.addf %143, %146 : vector<8x32xf32>
    %c6_55 = arith.constant 6 : index
    %148 = memref.load %arg2[%c6_55] : memref<32xf32, #tpu.memory_space<smem>>
    %149 = vector.broadcast %148 : f32 to vector<8x32xf32>
    %150 = arith.addf %147, %149 : vector<8x32xf32>
    %cst_56 = arith.constant 0.000000e+00 : f32
    %151 = vector.broadcast %cst_56 : f32 to vector<8x32xf32>
    %152 = arith.maximumf %150, %151 : vector<8x32xf32>
    %153 = vector.extract_strided_slice %3 {offsets = [6, 0], sizes = [1, 32], strides = [1, 1]} : vector<32x32xf32> to vector<1x32xf32>
    %154 = vector.shape_cast %153 : vector<1x32xf32> to vector<32xf32>
    %155 = vector.shape_cast %154 : vector<32xf32> to vector<1x32xf32>
    %156 = vector.broadcast %155 : vector<1x32xf32> to vector<8x32xf32>
    %157 = arith.mulf %152, %156 : vector<8x32xf32>
    %158 = arith.addf %136, %157 : vector<8x32xf32>
    %c0_57 = arith.constant 0 : index
    %c7 = arith.constant 7 : index
    %159 = memref.load %arg1[%c0_57, %c7] : memref<3x32xf32, #tpu.memory_space<smem>>
    %160 = vector.broadcast %159 : f32 to vector<8x32xf32>
    %161 = arith.mulf %160, %0 : vector<8x32xf32>
    %c1_58 = arith.constant 1 : index
    %c7_59 = arith.constant 7 : index
    %162 = memref.load %arg1[%c1_58, %c7_59] : memref<3x32xf32, #tpu.memory_space<smem>>
    %163 = vector.broadcast %162 : f32 to vector<8x32xf32>
    %164 = arith.mulf %163, %1 : vector<8x32xf32>
    %165 = arith.addf %161, %164 : vector<8x32xf32>
    %c2_60 = arith.constant 2 : index
    %c7_61 = arith.constant 7 : index
    %166 = memref.load %arg1[%c2_60, %c7_61] : memref<3x32xf32, #tpu.memory_space<smem>>
    %167 = vector.broadcast %166 : f32 to vector<8x32xf32>
    %168 = arith.mulf %167, %2 : vector<8x32xf32>
    %169 = arith.addf %165, %168 : vector<8x32xf32>
    %c7_62 = arith.constant 7 : index
    %170 = memref.load %arg2[%c7_62] : memref<32xf32, #tpu.memory_space<smem>>
    %171 = vector.broadcast %170 : f32 to vector<8x32xf32>
    %172 = arith.addf %169, %171 : vector<8x32xf32>
    %cst_63 = arith.constant 0.000000e+00 : f32
    %173 = vector.broadcast %cst_63 : f32 to vector<8x32xf32>
    %174 = arith.maximumf %172, %173 : vector<8x32xf32>
    %175 = vector.extract_strided_slice %3 {offsets = [7, 0], sizes = [1, 32], strides = [1, 1]} : vector<32x32xf32> to vector<1x32xf32>
    %176 = vector.shape_cast %175 : vector<1x32xf32> to vector<32xf32>
    %177 = vector.shape_cast %176 : vector<32xf32> to vector<1x32xf32>
    %178 = vector.broadcast %177 : vector<1x32xf32> to vector<8x32xf32>
    %179 = arith.mulf %174, %178 : vector<8x32xf32>
    %180 = arith.addf %158, %179 : vector<8x32xf32>
    %c0_64 = arith.constant 0 : index
    %c8 = arith.constant 8 : index
    %181 = memref.load %arg1[%c0_64, %c8] : memref<3x32xf32, #tpu.memory_space<smem>>
    %182 = vector.broadcast %181 : f32 to vector<8x32xf32>
    %183 = arith.mulf %182, %0 : vector<8x32xf32>
    %c1_65 = arith.constant 1 : index
    %c8_66 = arith.constant 8 : index
    %184 = memref.load %arg1[%c1_65, %c8_66] : memref<3x32xf32, #tpu.memory_space<smem>>
    %185 = vector.broadcast %184 : f32 to vector<8x32xf32>
    %186 = arith.mulf %185, %1 : vector<8x32xf32>
    %187 = arith.addf %183, %186 : vector<8x32xf32>
    %c2_67 = arith.constant 2 : index
    %c8_68 = arith.constant 8 : index
    %188 = memref.load %arg1[%c2_67, %c8_68] : memref<3x32xf32, #tpu.memory_space<smem>>
    %189 = vector.broadcast %188 : f32 to vector<8x32xf32>
    %190 = arith.mulf %189, %2 : vector<8x32xf32>
    %191 = arith.addf %187, %190 : vector<8x32xf32>
    %c8_69 = arith.constant 8 : index
    %192 = memref.load %arg2[%c8_69] : memref<32xf32, #tpu.memory_space<smem>>
    %193 = vector.broadcast %192 : f32 to vector<8x32xf32>
    %194 = arith.addf %191, %193 : vector<8x32xf32>
    %cst_70 = arith.constant 0.000000e+00 : f32
    %195 = vector.broadcast %cst_70 : f32 to vector<8x32xf32>
    %196 = arith.maximumf %194, %195 : vector<8x32xf32>
    %197 = vector.extract_strided_slice %3 {offsets = [8, 0], sizes = [1, 32], strides = [1, 1]} : vector<32x32xf32> to vector<1x32xf32>
    %198 = vector.shape_cast %197 : vector<1x32xf32> to vector<32xf32>
    %199 = vector.shape_cast %198 : vector<32xf32> to vector<1x32xf32>
    %200 = vector.broadcast %199 : vector<1x32xf32> to vector<8x32xf32>
    %201 = arith.mulf %196, %200 : vector<8x32xf32>
    %202 = arith.addf %180, %201 : vector<8x32xf32>
    %c0_71 = arith.constant 0 : index
    %c9 = arith.constant 9 : index
    %203 = memref.load %arg1[%c0_71, %c9] : memref<3x32xf32, #tpu.memory_space<smem>>
    %204 = vector.broadcast %203 : f32 to vector<8x32xf32>
    %205 = arith.mulf %204, %0 : vector<8x32xf32>
    %c1_72 = arith.constant 1 : index
    %c9_73 = arith.constant 9 : index
    %206 = memref.load %arg1[%c1_72, %c9_73] : memref<3x32xf32, #tpu.memory_space<smem>>
    %207 = vector.broadcast %206 : f32 to vector<8x32xf32>
    %208 = arith.mulf %207, %1 : vector<8x32xf32>
    %209 = arith.addf %205, %208 : vector<8x32xf32>
    %c2_74 = arith.constant 2 : index
    %c9_75 = arith.constant 9 : index
    %210 = memref.load %arg1[%c2_74, %c9_75] : memref<3x32xf32, #tpu.memory_space<smem>>
    %211 = vector.broadcast %210 : f32 to vector<8x32xf32>
    %212 = arith.mulf %211, %2 : vector<8x32xf32>
    %213 = arith.addf %209, %212 : vector<8x32xf32>
    %c9_76 = arith.constant 9 : index
    %214 = memref.load %arg2[%c9_76] : memref<32xf32, #tpu.memory_space<smem>>
    %215 = vector.broadcast %214 : f32 to vector<8x32xf32>
    %216 = arith.addf %213, %215 : vector<8x32xf32>
    %cst_77 = arith.constant 0.000000e+00 : f32
    %217 = vector.broadcast %cst_77 : f32 to vector<8x32xf32>
    %218 = arith.maximumf %216, %217 : vector<8x32xf32>
    %219 = vector.extract_strided_slice %3 {offsets = [9, 0], sizes = [1, 32], strides = [1, 1]} : vector<32x32xf32> to vector<1x32xf32>
    %220 = vector.shape_cast %219 : vector<1x32xf32> to vector<32xf32>
    %221 = vector.shape_cast %220 : vector<32xf32> to vector<1x32xf32>
    %222 = vector.broadcast %221 : vector<1x32xf32> to vector<8x32xf32>
    %223 = arith.mulf %218, %222 : vector<8x32xf32>
    %224 = arith.addf %202, %223 : vector<8x32xf32>
    %c0_78 = arith.constant 0 : index
    %c10 = arith.constant 10 : index
    %225 = memref.load %arg1[%c0_78, %c10] : memref<3x32xf32, #tpu.memory_space<smem>>
    %226 = vector.broadcast %225 : f32 to vector<8x32xf32>
    %227 = arith.mulf %226, %0 : vector<8x32xf32>
    %c1_79 = arith.constant 1 : index
    %c10_80 = arith.constant 10 : index
    %228 = memref.load %arg1[%c1_79, %c10_80] : memref<3x32xf32, #tpu.memory_space<smem>>
    %229 = vector.broadcast %228 : f32 to vector<8x32xf32>
    %230 = arith.mulf %229, %1 : vector<8x32xf32>
    %231 = arith.addf %227, %230 : vector<8x32xf32>
    %c2_81 = arith.constant 2 : index
    %c10_82 = arith.constant 10 : index
    %232 = memref.load %arg1[%c2_81, %c10_82] : memref<3x32xf32, #tpu.memory_space<smem>>
    %233 = vector.broadcast %232 : f32 to vector<8x32xf32>
    %234 = arith.mulf %233, %2 : vector<8x32xf32>
    %235 = arith.addf %231, %234 : vector<8x32xf32>
    %c10_83 = arith.constant 10 : index
    %236 = memref.load %arg2[%c10_83] : memref<32xf32, #tpu.memory_space<smem>>
    %237 = vector.broadcast %236 : f32 to vector<8x32xf32>
    %238 = arith.addf %235, %237 : vector<8x32xf32>
    %cst_84 = arith.constant 0.000000e+00 : f32
    %239 = vector.broadcast %cst_84 : f32 to vector<8x32xf32>
    %240 = arith.maximumf %238, %239 : vector<8x32xf32>
    %241 = vector.extract_strided_slice %3 {offsets = [10, 0], sizes = [1, 32], strides = [1, 1]} : vector<32x32xf32> to vector<1x32xf32>
    %242 = vector.shape_cast %241 : vector<1x32xf32> to vector<32xf32>
    %243 = vector.shape_cast %242 : vector<32xf32> to vector<1x32xf32>
    %244 = vector.broadcast %243 : vector<1x32xf32> to vector<8x32xf32>
    %245 = arith.mulf %240, %244 : vector<8x32xf32>
    %246 = arith.addf %224, %245 : vector<8x32xf32>
    %c0_85 = arith.constant 0 : index
    %c11 = arith.constant 11 : index
    %247 = memref.load %arg1[%c0_85, %c11] : memref<3x32xf32, #tpu.memory_space<smem>>
    %248 = vector.broadcast %247 : f32 to vector<8x32xf32>
    %249 = arith.mulf %248, %0 : vector<8x32xf32>
    %c1_86 = arith.constant 1 : index
    %c11_87 = arith.constant 11 : index
    %250 = memref.load %arg1[%c1_86, %c11_87] : memref<3x32xf32, #tpu.memory_space<smem>>
    %251 = vector.broadcast %250 : f32 to vector<8x32xf32>
    %252 = arith.mulf %251, %1 : vector<8x32xf32>
    %253 = arith.addf %249, %252 : vector<8x32xf32>
    %c2_88 = arith.constant 2 : index
    %c11_89 = arith.constant 11 : index
    %254 = memref.load %arg1[%c2_88, %c11_89] : memref<3x32xf32, #tpu.memory_space<smem>>
    %255 = vector.broadcast %254 : f32 to vector<8x32xf32>
    %256 = arith.mulf %255, %2 : vector<8x32xf32>
    %257 = arith.addf %253, %256 : vector<8x32xf32>
    %c11_90 = arith.constant 11 : index
    %258 = memref.load %arg2[%c11_90] : memref<32xf32, #tpu.memory_space<smem>>
    %259 = vector.broadcast %258 : f32 to vector<8x32xf32>
    %260 = arith.addf %257, %259 : vector<8x32xf32>
    %cst_91 = arith.constant 0.000000e+00 : f32
    %261 = vector.broadcast %cst_91 : f32 to vector<8x32xf32>
    %262 = arith.maximumf %260, %261 : vector<8x32xf32>
    %263 = vector.extract_strided_slice %3 {offsets = [11, 0], sizes = [1, 32], strides = [1, 1]} : vector<32x32xf32> to vector<1x32xf32>
    %264 = vector.shape_cast %263 : vector<1x32xf32> to vector<32xf32>
    %265 = vector.shape_cast %264 : vector<32xf32> to vector<1x32xf32>
    %266 = vector.broadcast %265 : vector<1x32xf32> to vector<8x32xf32>
    %267 = arith.mulf %262, %266 : vector<8x32xf32>
    %268 = arith.addf %246, %267 : vector<8x32xf32>
    %c0_92 = arith.constant 0 : index
    %c12 = arith.constant 12 : index
    %269 = memref.load %arg1[%c0_92, %c12] : memref<3x32xf32, #tpu.memory_space<smem>>
    %270 = vector.broadcast %269 : f32 to vector<8x32xf32>
    %271 = arith.mulf %270, %0 : vector<8x32xf32>
    %c1_93 = arith.constant 1 : index
    %c12_94 = arith.constant 12 : index
    %272 = memref.load %arg1[%c1_93, %c12_94] : memref<3x32xf32, #tpu.memory_space<smem>>
    %273 = vector.broadcast %272 : f32 to vector<8x32xf32>
    %274 = arith.mulf %273, %1 : vector<8x32xf32>
    %275 = arith.addf %271, %274 : vector<8x32xf32>
    %c2_95 = arith.constant 2 : index
    %c12_96 = arith.constant 12 : index
    %276 = memref.load %arg1[%c2_95, %c12_96] : memref<3x32xf32, #tpu.memory_space<smem>>
    %277 = vector.broadcast %276 : f32 to vector<8x32xf32>
    %278 = arith.mulf %277, %2 : vector<8x32xf32>
    %279 = arith.addf %275, %278 : vector<8x32xf32>
    %c12_97 = arith.constant 12 : index
    %280 = memref.load %arg2[%c12_97] : memref<32xf32, #tpu.memory_space<smem>>
    %281 = vector.broadcast %280 : f32 to vector<8x32xf32>
    %282 = arith.addf %279, %281 : vector<8x32xf32>
    %cst_98 = arith.constant 0.000000e+00 : f32
    %283 = vector.broadcast %cst_98 : f32 to vector<8x32xf32>
    %284 = arith.maximumf %282, %283 : vector<8x32xf32>
    %285 = vector.extract_strided_slice %3 {offsets = [12, 0], sizes = [1, 32], strides = [1, 1]} : vector<32x32xf32> to vector<1x32xf32>
    %286 = vector.shape_cast %285 : vector<1x32xf32> to vector<32xf32>
    %287 = vector.shape_cast %286 : vector<32xf32> to vector<1x32xf32>
    %288 = vector.broadcast %287 : vector<1x32xf32> to vector<8x32xf32>
    %289 = arith.mulf %284, %288 : vector<8x32xf32>
    %290 = arith.addf %268, %289 : vector<8x32xf32>
    %c0_99 = arith.constant 0 : index
    %c13 = arith.constant 13 : index
    %291 = memref.load %arg1[%c0_99, %c13] : memref<3x32xf32, #tpu.memory_space<smem>>
    %292 = vector.broadcast %291 : f32 to vector<8x32xf32>
    %293 = arith.mulf %292, %0 : vector<8x32xf32>
    %c1_100 = arith.constant 1 : index
    %c13_101 = arith.constant 13 : index
    %294 = memref.load %arg1[%c1_100, %c13_101] : memref<3x32xf32, #tpu.memory_space<smem>>
    %295 = vector.broadcast %294 : f32 to vector<8x32xf32>
    %296 = arith.mulf %295, %1 : vector<8x32xf32>
    %297 = arith.addf %293, %296 : vector<8x32xf32>
    %c2_102 = arith.constant 2 : index
    %c13_103 = arith.constant 13 : index
    %298 = memref.load %arg1[%c2_102, %c13_103] : memref<3x32xf32, #tpu.memory_space<smem>>
    %299 = vector.broadcast %298 : f32 to vector<8x32xf32>
    %300 = arith.mulf %299, %2 : vector<8x32xf32>
    %301 = arith.addf %297, %300 : vector<8x32xf32>
    %c13_104 = arith.constant 13 : index
    %302 = memref.load %arg2[%c13_104] : memref<32xf32, #tpu.memory_space<smem>>
    %303 = vector.broadcast %302 : f32 to vector<8x32xf32>
    %304 = arith.addf %301, %303 : vector<8x32xf32>
    %cst_105 = arith.constant 0.000000e+00 : f32
    %305 = vector.broadcast %cst_105 : f32 to vector<8x32xf32>
    %306 = arith.maximumf %304, %305 : vector<8x32xf32>
    %307 = vector.extract_strided_slice %3 {offsets = [13, 0], sizes = [1, 32], strides = [1, 1]} : vector<32x32xf32> to vector<1x32xf32>
    %308 = vector.shape_cast %307 : vector<1x32xf32> to vector<32xf32>
    %309 = vector.shape_cast %308 : vector<32xf32> to vector<1x32xf32>
    %310 = vector.broadcast %309 : vector<1x32xf32> to vector<8x32xf32>
    %311 = arith.mulf %306, %310 : vector<8x32xf32>
    %312 = arith.addf %290, %311 : vector<8x32xf32>
    %c0_106 = arith.constant 0 : index
    %c14 = arith.constant 14 : index
    %313 = memref.load %arg1[%c0_106, %c14] : memref<3x32xf32, #tpu.memory_space<smem>>
    %314 = vector.broadcast %313 : f32 to vector<8x32xf32>
    %315 = arith.mulf %314, %0 : vector<8x32xf32>
    %c1_107 = arith.constant 1 : index
    %c14_108 = arith.constant 14 : index
    %316 = memref.load %arg1[%c1_107, %c14_108] : memref<3x32xf32, #tpu.memory_space<smem>>
    %317 = vector.broadcast %316 : f32 to vector<8x32xf32>
    %318 = arith.mulf %317, %1 : vector<8x32xf32>
    %319 = arith.addf %315, %318 : vector<8x32xf32>
    %c2_109 = arith.constant 2 : index
    %c14_110 = arith.constant 14 : index
    %320 = memref.load %arg1[%c2_109, %c14_110] : memref<3x32xf32, #tpu.memory_space<smem>>
    %321 = vector.broadcast %320 : f32 to vector<8x32xf32>
    %322 = arith.mulf %321, %2 : vector<8x32xf32>
    %323 = arith.addf %319, %322 : vector<8x32xf32>
    %c14_111 = arith.constant 14 : index
    %324 = memref.load %arg2[%c14_111] : memref<32xf32, #tpu.memory_space<smem>>
    %325 = vector.broadcast %324 : f32 to vector<8x32xf32>
    %326 = arith.addf %323, %325 : vector<8x32xf32>
    %cst_112 = arith.constant 0.000000e+00 : f32
    %327 = vector.broadcast %cst_112 : f32 to vector<8x32xf32>
    %328 = arith.maximumf %326, %327 : vector<8x32xf32>
    %329 = vector.extract_strided_slice %3 {offsets = [14, 0], sizes = [1, 32], strides = [1, 1]} : vector<32x32xf32> to vector<1x32xf32>
    %330 = vector.shape_cast %329 : vector<1x32xf32> to vector<32xf32>
    %331 = vector.shape_cast %330 : vector<32xf32> to vector<1x32xf32>
    %332 = vector.broadcast %331 : vector<1x32xf32> to vector<8x32xf32>
    %333 = arith.mulf %328, %332 : vector<8x32xf32>
    %334 = arith.addf %312, %333 : vector<8x32xf32>
    %c0_113 = arith.constant 0 : index
    %c15 = arith.constant 15 : index
    %335 = memref.load %arg1[%c0_113, %c15] : memref<3x32xf32, #tpu.memory_space<smem>>
    %336 = vector.broadcast %335 : f32 to vector<8x32xf32>
    %337 = arith.mulf %336, %0 : vector<8x32xf32>
    %c1_114 = arith.constant 1 : index
    %c15_115 = arith.constant 15 : index
    %338 = memref.load %arg1[%c1_114, %c15_115] : memref<3x32xf32, #tpu.memory_space<smem>>
    %339 = vector.broadcast %338 : f32 to vector<8x32xf32>
    %340 = arith.mulf %339, %1 : vector<8x32xf32>
    %341 = arith.addf %337, %340 : vector<8x32xf32>
    %c2_116 = arith.constant 2 : index
    %c15_117 = arith.constant 15 : index
    %342 = memref.load %arg1[%c2_116, %c15_117] : memref<3x32xf32, #tpu.memory_space<smem>>
    %343 = vector.broadcast %342 : f32 to vector<8x32xf32>
    %344 = arith.mulf %343, %2 : vector<8x32xf32>
    %345 = arith.addf %341, %344 : vector<8x32xf32>
    %c15_118 = arith.constant 15 : index
    %346 = memref.load %arg2[%c15_118] : memref<32xf32, #tpu.memory_space<smem>>
    %347 = vector.broadcast %346 : f32 to vector<8x32xf32>
    %348 = arith.addf %345, %347 : vector<8x32xf32>
    %cst_119 = arith.constant 0.000000e+00 : f32
    %349 = vector.broadcast %cst_119 : f32 to vector<8x32xf32>
    %350 = arith.maximumf %348, %349 : vector<8x32xf32>
    %351 = vector.extract_strided_slice %3 {offsets = [15, 0], sizes = [1, 32], strides = [1, 1]} : vector<32x32xf32> to vector<1x32xf32>
    %352 = vector.shape_cast %351 : vector<1x32xf32> to vector<32xf32>
    %353 = vector.shape_cast %352 : vector<32xf32> to vector<1x32xf32>
    %354 = vector.broadcast %353 : vector<1x32xf32> to vector<8x32xf32>
    %355 = arith.mulf %350, %354 : vector<8x32xf32>
    %356 = arith.addf %334, %355 : vector<8x32xf32>
    %c0_120 = arith.constant 0 : index
    %c16 = arith.constant 16 : index
    %357 = memref.load %arg1[%c0_120, %c16] : memref<3x32xf32, #tpu.memory_space<smem>>
    %358 = vector.broadcast %357 : f32 to vector<8x32xf32>
    %359 = arith.mulf %358, %0 : vector<8x32xf32>
    %c1_121 = arith.constant 1 : index
    %c16_122 = arith.constant 16 : index
    %360 = memref.load %arg1[%c1_121, %c16_122] : memref<3x32xf32, #tpu.memory_space<smem>>
    %361 = vector.broadcast %360 : f32 to vector<8x32xf32>
    %362 = arith.mulf %361, %1 : vector<8x32xf32>
    %363 = arith.addf %359, %362 : vector<8x32xf32>
    %c2_123 = arith.constant 2 : index
    %c16_124 = arith.constant 16 : index
    %364 = memref.load %arg1[%c2_123, %c16_124] : memref<3x32xf32, #tpu.memory_space<smem>>
    %365 = vector.broadcast %364 : f32 to vector<8x32xf32>
    %366 = arith.mulf %365, %2 : vector<8x32xf32>
    %367 = arith.addf %363, %366 : vector<8x32xf32>
    %c16_125 = arith.constant 16 : index
    %368 = memref.load %arg2[%c16_125] : memref<32xf32, #tpu.memory_space<smem>>
    %369 = vector.broadcast %368 : f32 to vector<8x32xf32>
    %370 = arith.addf %367, %369 : vector<8x32xf32>
    %cst_126 = arith.constant 0.000000e+00 : f32
    %371 = vector.broadcast %cst_126 : f32 to vector<8x32xf32>
    %372 = arith.maximumf %370, %371 : vector<8x32xf32>
    %373 = vector.extract_strided_slice %3 {offsets = [16, 0], sizes = [1, 32], strides = [1, 1]} : vector<32x32xf32> to vector<1x32xf32>
    %374 = vector.shape_cast %373 : vector<1x32xf32> to vector<32xf32>
    %375 = vector.shape_cast %374 : vector<32xf32> to vector<1x32xf32>
    %376 = vector.broadcast %375 : vector<1x32xf32> to vector<8x32xf32>
    %377 = arith.mulf %372, %376 : vector<8x32xf32>
    %378 = arith.addf %356, %377 : vector<8x32xf32>
    %c0_127 = arith.constant 0 : index
    %c17 = arith.constant 17 : index
    %379 = memref.load %arg1[%c0_127, %c17] : memref<3x32xf32, #tpu.memory_space<smem>>
    %380 = vector.broadcast %379 : f32 to vector<8x32xf32>
    %381 = arith.mulf %380, %0 : vector<8x32xf32>
    %c1_128 = arith.constant 1 : index
    %c17_129 = arith.constant 17 : index
    %382 = memref.load %arg1[%c1_128, %c17_129] : memref<3x32xf32, #tpu.memory_space<smem>>
    %383 = vector.broadcast %382 : f32 to vector<8x32xf32>
    %384 = arith.mulf %383, %1 : vector<8x32xf32>
    %385 = arith.addf %381, %384 : vector<8x32xf32>
    %c2_130 = arith.constant 2 : index
    %c17_131 = arith.constant 17 : index
    %386 = memref.load %arg1[%c2_130, %c17_131] : memref<3x32xf32, #tpu.memory_space<smem>>
    %387 = vector.broadcast %386 : f32 to vector<8x32xf32>
    %388 = arith.mulf %387, %2 : vector<8x32xf32>
    %389 = arith.addf %385, %388 : vector<8x32xf32>
    %c17_132 = arith.constant 17 : index
    %390 = memref.load %arg2[%c17_132] : memref<32xf32, #tpu.memory_space<smem>>
    %391 = vector.broadcast %390 : f32 to vector<8x32xf32>
    %392 = arith.addf %389, %391 : vector<8x32xf32>
    %cst_133 = arith.constant 0.000000e+00 : f32
    %393 = vector.broadcast %cst_133 : f32 to vector<8x32xf32>
    %394 = arith.maximumf %392, %393 : vector<8x32xf32>
    %395 = vector.extract_strided_slice %3 {offsets = [17, 0], sizes = [1, 32], strides = [1, 1]} : vector<32x32xf32> to vector<1x32xf32>
    %396 = vector.shape_cast %395 : vector<1x32xf32> to vector<32xf32>
    %397 = vector.shape_cast %396 : vector<32xf32> to vector<1x32xf32>
    %398 = vector.broadcast %397 : vector<1x32xf32> to vector<8x32xf32>
    %399 = arith.mulf %394, %398 : vector<8x32xf32>
    %400 = arith.addf %378, %399 : vector<8x32xf32>
    %c0_134 = arith.constant 0 : index
    %c18 = arith.constant 18 : index
    %401 = memref.load %arg1[%c0_134, %c18] : memref<3x32xf32, #tpu.memory_space<smem>>
    %402 = vector.broadcast %401 : f32 to vector<8x32xf32>
    %403 = arith.mulf %402, %0 : vector<8x32xf32>
    %c1_135 = arith.constant 1 : index
    %c18_136 = arith.constant 18 : index
    %404 = memref.load %arg1[%c1_135, %c18_136] : memref<3x32xf32, #tpu.memory_space<smem>>
    %405 = vector.broadcast %404 : f32 to vector<8x32xf32>
    %406 = arith.mulf %405, %1 : vector<8x32xf32>
    %407 = arith.addf %403, %406 : vector<8x32xf32>
    %c2_137 = arith.constant 2 : index
    %c18_138 = arith.constant 18 : index
    %408 = memref.load %arg1[%c2_137, %c18_138] : memref<3x32xf32, #tpu.memory_space<smem>>
    %409 = vector.broadcast %408 : f32 to vector<8x32xf32>
    %410 = arith.mulf %409, %2 : vector<8x32xf32>
    %411 = arith.addf %407, %410 : vector<8x32xf32>
    %c18_139 = arith.constant 18 : index
    %412 = memref.load %arg2[%c18_139] : memref<32xf32, #tpu.memory_space<smem>>
    %413 = vector.broadcast %412 : f32 to vector<8x32xf32>
    %414 = arith.addf %411, %413 : vector<8x32xf32>
    %cst_140 = arith.constant 0.000000e+00 : f32
    %415 = vector.broadcast %cst_140 : f32 to vector<8x32xf32>
    %416 = arith.maximumf %414, %415 : vector<8x32xf32>
    %417 = vector.extract_strided_slice %3 {offsets = [18, 0], sizes = [1, 32], strides = [1, 1]} : vector<32x32xf32> to vector<1x32xf32>
    %418 = vector.shape_cast %417 : vector<1x32xf32> to vector<32xf32>
    %419 = vector.shape_cast %418 : vector<32xf32> to vector<1x32xf32>
    %420 = vector.broadcast %419 : vector<1x32xf32> to vector<8x32xf32>
    %421 = arith.mulf %416, %420 : vector<8x32xf32>
    %422 = arith.addf %400, %421 : vector<8x32xf32>
    %c0_141 = arith.constant 0 : index
    %c19 = arith.constant 19 : index
    %423 = memref.load %arg1[%c0_141, %c19] : memref<3x32xf32, #tpu.memory_space<smem>>
    %424 = vector.broadcast %423 : f32 to vector<8x32xf32>
    %425 = arith.mulf %424, %0 : vector<8x32xf32>
    %c1_142 = arith.constant 1 : index
    %c19_143 = arith.constant 19 : index
    %426 = memref.load %arg1[%c1_142, %c19_143] : memref<3x32xf32, #tpu.memory_space<smem>>
    %427 = vector.broadcast %426 : f32 to vector<8x32xf32>
    %428 = arith.mulf %427, %1 : vector<8x32xf32>
    %429 = arith.addf %425, %428 : vector<8x32xf32>
    %c2_144 = arith.constant 2 : index
    %c19_145 = arith.constant 19 : index
    %430 = memref.load %arg1[%c2_144, %c19_145] : memref<3x32xf32, #tpu.memory_space<smem>>
    %431 = vector.broadcast %430 : f32 to vector<8x32xf32>
    %432 = arith.mulf %431, %2 : vector<8x32xf32>
    %433 = arith.addf %429, %432 : vector<8x32xf32>
    %c19_146 = arith.constant 19 : index
    %434 = memref.load %arg2[%c19_146] : memref<32xf32, #tpu.memory_space<smem>>
    %435 = vector.broadcast %434 : f32 to vector<8x32xf32>
    %436 = arith.addf %433, %435 : vector<8x32xf32>
    %cst_147 = arith.constant 0.000000e+00 : f32
    %437 = vector.broadcast %cst_147 : f32 to vector<8x32xf32>
    %438 = arith.maximumf %436, %437 : vector<8x32xf32>
    %439 = vector.extract_strided_slice %3 {offsets = [19, 0], sizes = [1, 32], strides = [1, 1]} : vector<32x32xf32> to vector<1x32xf32>
    %440 = vector.shape_cast %439 : vector<1x32xf32> to vector<32xf32>
    %441 = vector.shape_cast %440 : vector<32xf32> to vector<1x32xf32>
    %442 = vector.broadcast %441 : vector<1x32xf32> to vector<8x32xf32>
    %443 = arith.mulf %438, %442 : vector<8x32xf32>
    %444 = arith.addf %422, %443 : vector<8x32xf32>
    %c0_148 = arith.constant 0 : index
    %c20 = arith.constant 20 : index
    %445 = memref.load %arg1[%c0_148, %c20] : memref<3x32xf32, #tpu.memory_space<smem>>
    %446 = vector.broadcast %445 : f32 to vector<8x32xf32>
    %447 = arith.mulf %446, %0 : vector<8x32xf32>
    %c1_149 = arith.constant 1 : index
    %c20_150 = arith.constant 20 : index
    %448 = memref.load %arg1[%c1_149, %c20_150] : memref<3x32xf32, #tpu.memory_space<smem>>
    %449 = vector.broadcast %448 : f32 to vector<8x32xf32>
    %450 = arith.mulf %449, %1 : vector<8x32xf32>
    %451 = arith.addf %447, %450 : vector<8x32xf32>
    %c2_151 = arith.constant 2 : index
    %c20_152 = arith.constant 20 : index
    %452 = memref.load %arg1[%c2_151, %c20_152] : memref<3x32xf32, #tpu.memory_space<smem>>
    %453 = vector.broadcast %452 : f32 to vector<8x32xf32>
    %454 = arith.mulf %453, %2 : vector<8x32xf32>
    %455 = arith.addf %451, %454 : vector<8x32xf32>
    %c20_153 = arith.constant 20 : index
    %456 = memref.load %arg2[%c20_153] : memref<32xf32, #tpu.memory_space<smem>>
    %457 = vector.broadcast %456 : f32 to vector<8x32xf32>
    %458 = arith.addf %455, %457 : vector<8x32xf32>
    %cst_154 = arith.constant 0.000000e+00 : f32
    %459 = vector.broadcast %cst_154 : f32 to vector<8x32xf32>
    %460 = arith.maximumf %458, %459 : vector<8x32xf32>
    %461 = vector.extract_strided_slice %3 {offsets = [20, 0], sizes = [1, 32], strides = [1, 1]} : vector<32x32xf32> to vector<1x32xf32>
    %462 = vector.shape_cast %461 : vector<1x32xf32> to vector<32xf32>
    %463 = vector.shape_cast %462 : vector<32xf32> to vector<1x32xf32>
    %464 = vector.broadcast %463 : vector<1x32xf32> to vector<8x32xf32>
    %465 = arith.mulf %460, %464 : vector<8x32xf32>
    %466 = arith.addf %444, %465 : vector<8x32xf32>
    %c0_155 = arith.constant 0 : index
    %c21 = arith.constant 21 : index
    %467 = memref.load %arg1[%c0_155, %c21] : memref<3x32xf32, #tpu.memory_space<smem>>
    %468 = vector.broadcast %467 : f32 to vector<8x32xf32>
    %469 = arith.mulf %468, %0 : vector<8x32xf32>
    %c1_156 = arith.constant 1 : index
    %c21_157 = arith.constant 21 : index
    %470 = memref.load %arg1[%c1_156, %c21_157] : memref<3x32xf32, #tpu.memory_space<smem>>
    %471 = vector.broadcast %470 : f32 to vector<8x32xf32>
    %472 = arith.mulf %471, %1 : vector<8x32xf32>
    %473 = arith.addf %469, %472 : vector<8x32xf32>
    %c2_158 = arith.constant 2 : index
    %c21_159 = arith.constant 21 : index
    %474 = memref.load %arg1[%c2_158, %c21_159] : memref<3x32xf32, #tpu.memory_space<smem>>
    %475 = vector.broadcast %474 : f32 to vector<8x32xf32>
    %476 = arith.mulf %475, %2 : vector<8x32xf32>
    %477 = arith.addf %473, %476 : vector<8x32xf32>
    %c21_160 = arith.constant 21 : index
    %478 = memref.load %arg2[%c21_160] : memref<32xf32, #tpu.memory_space<smem>>
    %479 = vector.broadcast %478 : f32 to vector<8x32xf32>
    %480 = arith.addf %477, %479 : vector<8x32xf32>
    %cst_161 = arith.constant 0.000000e+00 : f32
    %481 = vector.broadcast %cst_161 : f32 to vector<8x32xf32>
    %482 = arith.maximumf %480, %481 : vector<8x32xf32>
    %483 = vector.extract_strided_slice %3 {offsets = [21, 0], sizes = [1, 32], strides = [1, 1]} : vector<32x32xf32> to vector<1x32xf32>
    %484 = vector.shape_cast %483 : vector<1x32xf32> to vector<32xf32>
    %485 = vector.shape_cast %484 : vector<32xf32> to vector<1x32xf32>
    %486 = vector.broadcast %485 : vector<1x32xf32> to vector<8x32xf32>
    %487 = arith.mulf %482, %486 : vector<8x32xf32>
    %488 = arith.addf %466, %487 : vector<8x32xf32>
    %c0_162 = arith.constant 0 : index
    %c22 = arith.constant 22 : index
    %489 = memref.load %arg1[%c0_162, %c22] : memref<3x32xf32, #tpu.memory_space<smem>>
    %490 = vector.broadcast %489 : f32 to vector<8x32xf32>
    %491 = arith.mulf %490, %0 : vector<8x32xf32>
    %c1_163 = arith.constant 1 : index
    %c22_164 = arith.constant 22 : index
    %492 = memref.load %arg1[%c1_163, %c22_164] : memref<3x32xf32, #tpu.memory_space<smem>>
    %493 = vector.broadcast %492 : f32 to vector<8x32xf32>
    %494 = arith.mulf %493, %1 : vector<8x32xf32>
    %495 = arith.addf %491, %494 : vector<8x32xf32>
    %c2_165 = arith.constant 2 : index
    %c22_166 = arith.constant 22 : index
    %496 = memref.load %arg1[%c2_165, %c22_166] : memref<3x32xf32, #tpu.memory_space<smem>>
    %497 = vector.broadcast %496 : f32 to vector<8x32xf32>
    %498 = arith.mulf %497, %2 : vector<8x32xf32>
    %499 = arith.addf %495, %498 : vector<8x32xf32>
    %c22_167 = arith.constant 22 : index
    %500 = memref.load %arg2[%c22_167] : memref<32xf32, #tpu.memory_space<smem>>
    %501 = vector.broadcast %500 : f32 to vector<8x32xf32>
    %502 = arith.addf %499, %501 : vector<8x32xf32>
    %cst_168 = arith.constant 0.000000e+00 : f32
    %503 = vector.broadcast %cst_168 : f32 to vector<8x32xf32>
    %504 = arith.maximumf %502, %503 : vector<8x32xf32>
    %505 = vector.extract_strided_slice %3 {offsets = [22, 0], sizes = [1, 32], strides = [1, 1]} : vector<32x32xf32> to vector<1x32xf32>
    %506 = vector.shape_cast %505 : vector<1x32xf32> to vector<32xf32>
    %507 = vector.shape_cast %506 : vector<32xf32> to vector<1x32xf32>
    %508 = vector.broadcast %507 : vector<1x32xf32> to vector<8x32xf32>
    %509 = arith.mulf %504, %508 : vector<8x32xf32>
    %510 = arith.addf %488, %509 : vector<8x32xf32>
    %c0_169 = arith.constant 0 : index
    %c23 = arith.constant 23 : index
    %511 = memref.load %arg1[%c0_169, %c23] : memref<3x32xf32, #tpu.memory_space<smem>>
    %512 = vector.broadcast %511 : f32 to vector<8x32xf32>
    %513 = arith.mulf %512, %0 : vector<8x32xf32>
    %c1_170 = arith.constant 1 : index
    %c23_171 = arith.constant 23 : index
    %514 = memref.load %arg1[%c1_170, %c23_171] : memref<3x32xf32, #tpu.memory_space<smem>>
    %515 = vector.broadcast %514 : f32 to vector<8x32xf32>
    %516 = arith.mulf %515, %1 : vector<8x32xf32>
    %517 = arith.addf %513, %516 : vector<8x32xf32>
    %c2_172 = arith.constant 2 : index
    %c23_173 = arith.constant 23 : index
    %518 = memref.load %arg1[%c2_172, %c23_173] : memref<3x32xf32, #tpu.memory_space<smem>>
    %519 = vector.broadcast %518 : f32 to vector<8x32xf32>
    %520 = arith.mulf %519, %2 : vector<8x32xf32>
    %521 = arith.addf %517, %520 : vector<8x32xf32>
    %c23_174 = arith.constant 23 : index
    %522 = memref.load %arg2[%c23_174] : memref<32xf32, #tpu.memory_space<smem>>
    %523 = vector.broadcast %522 : f32 to vector<8x32xf32>
    %524 = arith.addf %521, %523 : vector<8x32xf32>
    %cst_175 = arith.constant 0.000000e+00 : f32
    %525 = vector.broadcast %cst_175 : f32 to vector<8x32xf32>
    %526 = arith.maximumf %524, %525 : vector<8x32xf32>
    %527 = vector.extract_strided_slice %3 {offsets = [23, 0], sizes = [1, 32], strides = [1, 1]} : vector<32x32xf32> to vector<1x32xf32>
    %528 = vector.shape_cast %527 : vector<1x32xf32> to vector<32xf32>
    %529 = vector.shape_cast %528 : vector<32xf32> to vector<1x32xf32>
    %530 = vector.broadcast %529 : vector<1x32xf32> to vector<8x32xf32>
    %531 = arith.mulf %526, %530 : vector<8x32xf32>
    %532 = arith.addf %510, %531 : vector<8x32xf32>
    %c0_176 = arith.constant 0 : index
    %c24 = arith.constant 24 : index
    %533 = memref.load %arg1[%c0_176, %c24] : memref<3x32xf32, #tpu.memory_space<smem>>
    %534 = vector.broadcast %533 : f32 to vector<8x32xf32>
    %535 = arith.mulf %534, %0 : vector<8x32xf32>
    %c1_177 = arith.constant 1 : index
    %c24_178 = arith.constant 24 : index
    %536 = memref.load %arg1[%c1_177, %c24_178] : memref<3x32xf32, #tpu.memory_space<smem>>
    %537 = vector.broadcast %536 : f32 to vector<8x32xf32>
    %538 = arith.mulf %537, %1 : vector<8x32xf32>
    %539 = arith.addf %535, %538 : vector<8x32xf32>
    %c2_179 = arith.constant 2 : index
    %c24_180 = arith.constant 24 : index
    %540 = memref.load %arg1[%c2_179, %c24_180] : memref<3x32xf32, #tpu.memory_space<smem>>
    %541 = vector.broadcast %540 : f32 to vector<8x32xf32>
    %542 = arith.mulf %541, %2 : vector<8x32xf32>
    %543 = arith.addf %539, %542 : vector<8x32xf32>
    %c24_181 = arith.constant 24 : index
    %544 = memref.load %arg2[%c24_181] : memref<32xf32, #tpu.memory_space<smem>>
    %545 = vector.broadcast %544 : f32 to vector<8x32xf32>
    %546 = arith.addf %543, %545 : vector<8x32xf32>
    %cst_182 = arith.constant 0.000000e+00 : f32
    %547 = vector.broadcast %cst_182 : f32 to vector<8x32xf32>
    %548 = arith.maximumf %546, %547 : vector<8x32xf32>
    %549 = vector.extract_strided_slice %3 {offsets = [24, 0], sizes = [1, 32], strides = [1, 1]} : vector<32x32xf32> to vector<1x32xf32>
    %550 = vector.shape_cast %549 : vector<1x32xf32> to vector<32xf32>
    %551 = vector.shape_cast %550 : vector<32xf32> to vector<1x32xf32>
    %552 = vector.broadcast %551 : vector<1x32xf32> to vector<8x32xf32>
    %553 = arith.mulf %548, %552 : vector<8x32xf32>
    %554 = arith.addf %532, %553 : vector<8x32xf32>
    %c0_183 = arith.constant 0 : index
    %c25 = arith.constant 25 : index
    %555 = memref.load %arg1[%c0_183, %c25] : memref<3x32xf32, #tpu.memory_space<smem>>
    %556 = vector.broadcast %555 : f32 to vector<8x32xf32>
    %557 = arith.mulf %556, %0 : vector<8x32xf32>
    %c1_184 = arith.constant 1 : index
    %c25_185 = arith.constant 25 : index
    %558 = memref.load %arg1[%c1_184, %c25_185] : memref<3x32xf32, #tpu.memory_space<smem>>
    %559 = vector.broadcast %558 : f32 to vector<8x32xf32>
    %560 = arith.mulf %559, %1 : vector<8x32xf32>
    %561 = arith.addf %557, %560 : vector<8x32xf32>
    %c2_186 = arith.constant 2 : index
    %c25_187 = arith.constant 25 : index
    %562 = memref.load %arg1[%c2_186, %c25_187] : memref<3x32xf32, #tpu.memory_space<smem>>
    %563 = vector.broadcast %562 : f32 to vector<8x32xf32>
    %564 = arith.mulf %563, %2 : vector<8x32xf32>
    %565 = arith.addf %561, %564 : vector<8x32xf32>
    %c25_188 = arith.constant 25 : index
    %566 = memref.load %arg2[%c25_188] : memref<32xf32, #tpu.memory_space<smem>>
    %567 = vector.broadcast %566 : f32 to vector<8x32xf32>
    %568 = arith.addf %565, %567 : vector<8x32xf32>
    %cst_189 = arith.constant 0.000000e+00 : f32
    %569 = vector.broadcast %cst_189 : f32 to vector<8x32xf32>
    %570 = arith.maximumf %568, %569 : vector<8x32xf32>
    %571 = vector.extract_strided_slice %3 {offsets = [25, 0], sizes = [1, 32], strides = [1, 1]} : vector<32x32xf32> to vector<1x32xf32>
    %572 = vector.shape_cast %571 : vector<1x32xf32> to vector<32xf32>
    %573 = vector.shape_cast %572 : vector<32xf32> to vector<1x32xf32>
    %574 = vector.broadcast %573 : vector<1x32xf32> to vector<8x32xf32>
    %575 = arith.mulf %570, %574 : vector<8x32xf32>
    %576 = arith.addf %554, %575 : vector<8x32xf32>
    %c0_190 = arith.constant 0 : index
    %c26 = arith.constant 26 : index
    %577 = memref.load %arg1[%c0_190, %c26] : memref<3x32xf32, #tpu.memory_space<smem>>
    %578 = vector.broadcast %577 : f32 to vector<8x32xf32>
    %579 = arith.mulf %578, %0 : vector<8x32xf32>
    %c1_191 = arith.constant 1 : index
    %c26_192 = arith.constant 26 : index
    %580 = memref.load %arg1[%c1_191, %c26_192] : memref<3x32xf32, #tpu.memory_space<smem>>
    %581 = vector.broadcast %580 : f32 to vector<8x32xf32>
    %582 = arith.mulf %581, %1 : vector<8x32xf32>
    %583 = arith.addf %579, %582 : vector<8x32xf32>
    %c2_193 = arith.constant 2 : index
    %c26_194 = arith.constant 26 : index
    %584 = memref.load %arg1[%c2_193, %c26_194] : memref<3x32xf32, #tpu.memory_space<smem>>
    %585 = vector.broadcast %584 : f32 to vector<8x32xf32>
    %586 = arith.mulf %585, %2 : vector<8x32xf32>
    %587 = arith.addf %583, %586 : vector<8x32xf32>
    %c26_195 = arith.constant 26 : index
    %588 = memref.load %arg2[%c26_195] : memref<32xf32, #tpu.memory_space<smem>>
    %589 = vector.broadcast %588 : f32 to vector<8x32xf32>
    %590 = arith.addf %587, %589 : vector<8x32xf32>
    %cst_196 = arith.constant 0.000000e+00 : f32
    %591 = vector.broadcast %cst_196 : f32 to vector<8x32xf32>
    %592 = arith.maximumf %590, %591 : vector<8x32xf32>
    %593 = vector.extract_strided_slice %3 {offsets = [26, 0], sizes = [1, 32], strides = [1, 1]} : vector<32x32xf32> to vector<1x32xf32>
    %594 = vector.shape_cast %593 : vector<1x32xf32> to vector<32xf32>
    %595 = vector.shape_cast %594 : vector<32xf32> to vector<1x32xf32>
    %596 = vector.broadcast %595 : vector<1x32xf32> to vector<8x32xf32>
    %597 = arith.mulf %592, %596 : vector<8x32xf32>
    %598 = arith.addf %576, %597 : vector<8x32xf32>
    %c0_197 = arith.constant 0 : index
    %c27 = arith.constant 27 : index
    %599 = memref.load %arg1[%c0_197, %c27] : memref<3x32xf32, #tpu.memory_space<smem>>
    %600 = vector.broadcast %599 : f32 to vector<8x32xf32>
    %601 = arith.mulf %600, %0 : vector<8x32xf32>
    %c1_198 = arith.constant 1 : index
    %c27_199 = arith.constant 27 : index
    %602 = memref.load %arg1[%c1_198, %c27_199] : memref<3x32xf32, #tpu.memory_space<smem>>
    %603 = vector.broadcast %602 : f32 to vector<8x32xf32>
    %604 = arith.mulf %603, %1 : vector<8x32xf32>
    %605 = arith.addf %601, %604 : vector<8x32xf32>
    %c2_200 = arith.constant 2 : index
    %c27_201 = arith.constant 27 : index
    %606 = memref.load %arg1[%c2_200, %c27_201] : memref<3x32xf32, #tpu.memory_space<smem>>
    %607 = vector.broadcast %606 : f32 to vector<8x32xf32>
    %608 = arith.mulf %607, %2 : vector<8x32xf32>
    %609 = arith.addf %605, %608 : vector<8x32xf32>
    %c27_202 = arith.constant 27 : index
    %610 = memref.load %arg2[%c27_202] : memref<32xf32, #tpu.memory_space<smem>>
    %611 = vector.broadcast %610 : f32 to vector<8x32xf32>
    %612 = arith.addf %609, %611 : vector<8x32xf32>
    %cst_203 = arith.constant 0.000000e+00 : f32
    %613 = vector.broadcast %cst_203 : f32 to vector<8x32xf32>
    %614 = arith.maximumf %612, %613 : vector<8x32xf32>
    %615 = vector.extract_strided_slice %3 {offsets = [27, 0], sizes = [1, 32], strides = [1, 1]} : vector<32x32xf32> to vector<1x32xf32>
    %616 = vector.shape_cast %615 : vector<1x32xf32> to vector<32xf32>
    %617 = vector.shape_cast %616 : vector<32xf32> to vector<1x32xf32>
    %618 = vector.broadcast %617 : vector<1x32xf32> to vector<8x32xf32>
    %619 = arith.mulf %614, %618 : vector<8x32xf32>
    %620 = arith.addf %598, %619 : vector<8x32xf32>
    %c0_204 = arith.constant 0 : index
    %c28 = arith.constant 28 : index
    %621 = memref.load %arg1[%c0_204, %c28] : memref<3x32xf32, #tpu.memory_space<smem>>
    %622 = vector.broadcast %621 : f32 to vector<8x32xf32>
    %623 = arith.mulf %622, %0 : vector<8x32xf32>
    %c1_205 = arith.constant 1 : index
    %c28_206 = arith.constant 28 : index
    %624 = memref.load %arg1[%c1_205, %c28_206] : memref<3x32xf32, #tpu.memory_space<smem>>
    %625 = vector.broadcast %624 : f32 to vector<8x32xf32>
    %626 = arith.mulf %625, %1 : vector<8x32xf32>
    %627 = arith.addf %623, %626 : vector<8x32xf32>
    %c2_207 = arith.constant 2 : index
    %c28_208 = arith.constant 28 : index
    %628 = memref.load %arg1[%c2_207, %c28_208] : memref<3x32xf32, #tpu.memory_space<smem>>
    %629 = vector.broadcast %628 : f32 to vector<8x32xf32>
    %630 = arith.mulf %629, %2 : vector<8x32xf32>
    %631 = arith.addf %627, %630 : vector<8x32xf32>
    %c28_209 = arith.constant 28 : index
    %632 = memref.load %arg2[%c28_209] : memref<32xf32, #tpu.memory_space<smem>>
    %633 = vector.broadcast %632 : f32 to vector<8x32xf32>
    %634 = arith.addf %631, %633 : vector<8x32xf32>
    %cst_210 = arith.constant 0.000000e+00 : f32
    %635 = vector.broadcast %cst_210 : f32 to vector<8x32xf32>
    %636 = arith.maximumf %634, %635 : vector<8x32xf32>
    %637 = vector.extract_strided_slice %3 {offsets = [28, 0], sizes = [1, 32], strides = [1, 1]} : vector<32x32xf32> to vector<1x32xf32>
    %638 = vector.shape_cast %637 : vector<1x32xf32> to vector<32xf32>
    %639 = vector.shape_cast %638 : vector<32xf32> to vector<1x32xf32>
    %640 = vector.broadcast %639 : vector<1x32xf32> to vector<8x32xf32>
    %641 = arith.mulf %636, %640 : vector<8x32xf32>
    %642 = arith.addf %620, %641 : vector<8x32xf32>
    %c0_211 = arith.constant 0 : index
    %c29 = arith.constant 29 : index
    %643 = memref.load %arg1[%c0_211, %c29] : memref<3x32xf32, #tpu.memory_space<smem>>
    %644 = vector.broadcast %643 : f32 to vector<8x32xf32>
    %645 = arith.mulf %644, %0 : vector<8x32xf32>
    %c1_212 = arith.constant 1 : index
    %c29_213 = arith.constant 29 : index
    %646 = memref.load %arg1[%c1_212, %c29_213] : memref<3x32xf32, #tpu.memory_space<smem>>
    %647 = vector.broadcast %646 : f32 to vector<8x32xf32>
    %648 = arith.mulf %647, %1 : vector<8x32xf32>
    %649 = arith.addf %645, %648 : vector<8x32xf32>
    %c2_214 = arith.constant 2 : index
    %c29_215 = arith.constant 29 : index
    %650 = memref.load %arg1[%c2_214, %c29_215] : memref<3x32xf32, #tpu.memory_space<smem>>
    %651 = vector.broadcast %650 : f32 to vector<8x32xf32>
    %652 = arith.mulf %651, %2 : vector<8x32xf32>
    %653 = arith.addf %649, %652 : vector<8x32xf32>
    %c29_216 = arith.constant 29 : index
    %654 = memref.load %arg2[%c29_216] : memref<32xf32, #tpu.memory_space<smem>>
    %655 = vector.broadcast %654 : f32 to vector<8x32xf32>
    %656 = arith.addf %653, %655 : vector<8x32xf32>
    %cst_217 = arith.constant 0.000000e+00 : f32
    %657 = vector.broadcast %cst_217 : f32 to vector<8x32xf32>
    %658 = arith.maximumf %656, %657 : vector<8x32xf32>
    %659 = vector.extract_strided_slice %3 {offsets = [29, 0], sizes = [1, 32], strides = [1, 1]} : vector<32x32xf32> to vector<1x32xf32>
    %660 = vector.shape_cast %659 : vector<1x32xf32> to vector<32xf32>
    %661 = vector.shape_cast %660 : vector<32xf32> to vector<1x32xf32>
    %662 = vector.broadcast %661 : vector<1x32xf32> to vector<8x32xf32>
    %663 = arith.mulf %658, %662 : vector<8x32xf32>
    %664 = arith.addf %642, %663 : vector<8x32xf32>
    %c0_218 = arith.constant 0 : index
    %c30 = arith.constant 30 : index
    %665 = memref.load %arg1[%c0_218, %c30] : memref<3x32xf32, #tpu.memory_space<smem>>
    %666 = vector.broadcast %665 : f32 to vector<8x32xf32>
    %667 = arith.mulf %666, %0 : vector<8x32xf32>
    %c1_219 = arith.constant 1 : index
    %c30_220 = arith.constant 30 : index
    %668 = memref.load %arg1[%c1_219, %c30_220] : memref<3x32xf32, #tpu.memory_space<smem>>
    %669 = vector.broadcast %668 : f32 to vector<8x32xf32>
    %670 = arith.mulf %669, %1 : vector<8x32xf32>
    %671 = arith.addf %667, %670 : vector<8x32xf32>
    %c2_221 = arith.constant 2 : index
    %c30_222 = arith.constant 30 : index
    %672 = memref.load %arg1[%c2_221, %c30_222] : memref<3x32xf32, #tpu.memory_space<smem>>
    %673 = vector.broadcast %672 : f32 to vector<8x32xf32>
    %674 = arith.mulf %673, %2 : vector<8x32xf32>
    %675 = arith.addf %671, %674 : vector<8x32xf32>
    %c30_223 = arith.constant 30 : index
    %676 = memref.load %arg2[%c30_223] : memref<32xf32, #tpu.memory_space<smem>>
    %677 = vector.broadcast %676 : f32 to vector<8x32xf32>
    %678 = arith.addf %675, %677 : vector<8x32xf32>
    %cst_224 = arith.constant 0.000000e+00 : f32
    %679 = vector.broadcast %cst_224 : f32 to vector<8x32xf32>
    %680 = arith.maximumf %678, %679 : vector<8x32xf32>
    %681 = vector.extract_strided_slice %3 {offsets = [30, 0], sizes = [1, 32], strides = [1, 1]} : vector<32x32xf32> to vector<1x32xf32>
    %682 = vector.shape_cast %681 : vector<1x32xf32> to vector<32xf32>
    %683 = vector.shape_cast %682 : vector<32xf32> to vector<1x32xf32>
    %684 = vector.broadcast %683 : vector<1x32xf32> to vector<8x32xf32>
    %685 = arith.mulf %680, %684 : vector<8x32xf32>
    %686 = arith.addf %664, %685 : vector<8x32xf32>
    %c0_225 = arith.constant 0 : index
    %c31 = arith.constant 31 : index
    %687 = memref.load %arg1[%c0_225, %c31] : memref<3x32xf32, #tpu.memory_space<smem>>
    %688 = vector.broadcast %687 : f32 to vector<8x32xf32>
    %689 = arith.mulf %688, %0 : vector<8x32xf32>
    %c1_226 = arith.constant 1 : index
    %c31_227 = arith.constant 31 : index
    %690 = memref.load %arg1[%c1_226, %c31_227] : memref<3x32xf32, #tpu.memory_space<smem>>
    %691 = vector.broadcast %690 : f32 to vector<8x32xf32>
    %692 = arith.mulf %691, %1 : vector<8x32xf32>
    %693 = arith.addf %689, %692 : vector<8x32xf32>
    %c2_228 = arith.constant 2 : index
    %c31_229 = arith.constant 31 : index
    %694 = memref.load %arg1[%c2_228, %c31_229] : memref<3x32xf32, #tpu.memory_space<smem>>
    %695 = vector.broadcast %694 : f32 to vector<8x32xf32>
    %696 = arith.mulf %695, %2 : vector<8x32xf32>
    %697 = arith.addf %693, %696 : vector<8x32xf32>
    %c31_230 = arith.constant 31 : index
    %698 = memref.load %arg2[%c31_230] : memref<32xf32, #tpu.memory_space<smem>>
    %699 = vector.broadcast %698 : f32 to vector<8x32xf32>
    %700 = arith.addf %697, %699 : vector<8x32xf32>
    %cst_231 = arith.constant 0.000000e+00 : f32
    %701 = vector.broadcast %cst_231 : f32 to vector<8x32xf32>
    %702 = arith.maximumf %700, %701 : vector<8x32xf32>
    %703 = vector.extract_strided_slice %3 {offsets = [31, 0], sizes = [1, 32], strides = [1, 1]} : vector<32x32xf32> to vector<1x32xf32>
    %704 = vector.shape_cast %703 : vector<1x32xf32> to vector<32xf32>
    %705 = vector.shape_cast %704 : vector<32xf32> to vector<1x32xf32>
    %706 = vector.broadcast %705 : vector<1x32xf32> to vector<8x32xf32>
    %707 = arith.mulf %702, %706 : vector<8x32xf32>
    %708 = arith.addf %686, %707 : vector<8x32xf32>
    %cst_232 = arith.constant dense<0.000000e+00> : vector<8xf32>
    %709 = vector.multi_reduction <add>, %708, %cst_232 [1] : vector<8x32xf32> to vector<8xf32>
    %710 = vector.shape_cast %709 : vector<8xf32> to vector<8x1xf32>
    %cst_233 = arith.constant 0.000000e+00 : f32
    %711 = vector.broadcast %cst_233 : f32 to vector<8x1xf32>
    %712 = arith.subf %711, %710 : vector<8x1xf32>
    %c0_234 = arith.constant 0 : index
    %c0_235 = arith.constant 0 : index
    %713 = vector.load %arg7[%c0_234, %c0_235] : memref<8x1xf32, #tpu.memory_space<vmem>>, vector<8x1xf32>
    tpu.vector_store %arg7[%c0_234, %c0_235], %712 {strides = array<i32>} : memref<8x1xf32, #tpu.memory_space<vmem>>, vector<8x1xf32>,
    return
  }
  func.func @transform_0(%arg0: i32) -> (i32, i32) {
    %c0_i32 = arith.constant 0 : i32
    %c0_i32_0 = arith.constant 0 : i32
    %c0_i32_1 = arith.constant 0 : i32
    return %c0_i32, %c0_i32_0 : i32, i32
  }
  func.func @transform_1(%arg0: i32) -> i32 {
    %c0_i32 = arith.constant 0 : i32
    %c0_i32_0 = arith.constant 0 : i32
    return %c0_i32 : i32
  }
  func.func @transform_2(%arg0: i32) -> (i32, i32) {
    %c0_i32 = arith.constant 0 : i32
    %c0_i32_0 = arith.constant 0 : i32
    %c0_i32_1 = arith.constant 0 : i32
    return %c0_i32, %c0_i32_0 : i32, i32
  }
  func.func @transform_3(%arg0: i32) -> (i32, i32) {
    %c0_i32 = arith.constant 0 : i32
    %c0_i32_0 = arith.constant 0 : i32
    return %arg0, %c0_i32 : i32, i32
  }
  func.func @transform_4(%arg0: i32) -> (i32, i32) {
    %c0_i32 = arith.constant 0 : i32
    %c0_i32_0 = arith.constant 0 : i32
    return %arg0, %c0_i32 : i32, i32
  }
  func.func @transform_5(%arg0: i32) -> (i32, i32) {
    %c0_i32 = arith.constant 0 : i32
    %c0_i32_0 = arith.constant 0 : i32
    return %arg0, %c0_i32 : i32, i32
  }
  func.func @transform_6(%arg0: i32) -> (i32, i32) {
    %c0_i32 = arith.constant 0 : i32
    %c0_i32_0 = arith.constant 0 : i32
    return %arg0, %c0_i32 : i32, i32
  }
}

</mosaic_0001>

<llo_original>
// kernel: convkb_forward_pallas.1
$region0: #{convkb_forward_pallas.1}
  #allocation0 [shape = 'u32[]', space=smem, size = 0x4, offset = 0x4, fixed_abs, tag = 'smem constant byte address 0x4 - core index']
  #allocation1 [shape = 'u32[144,128]{1,0:T(1,128)}', space=vmem, size = 0x12000, scoped, tag = 'internal scratch']
  %s0 = inlined_call_operand.vmem [shape: f32[3,32], index: 0, kind: input, shape index: {}]
  %s1 = inlined_call_operand.vmem [shape: f32[32], index: 1, kind: input, shape index: {}]
  %s2 = inlined_call_operand.vmem [shape: f32[32,32], index: 2, kind: input, shape index: {}]
  %s3 = inlined_call_operand.vmem [shape: f32[16,32], index: 3, kind: input, shape index: {}]
  %s4 = inlined_call_operand.vmem [shape: f32[16,32], index: 4, kind: input, shape index: {}]
  %s5 = inlined_call_operand.vmem [shape: f32[16,32], index: 5, kind: input, shape index: {}]
  %s6 = inlined_call_operand.vmem [shape: f32[16,1], index: 6, kind: output, shape index: {}]
  %s7 = sld [smem:[#allocation0]]
  $region65: #{convkb_forward_pallas.1} parent=0
    _
  %s9 = ssub.s32 1, %s7
  %s10 = scalar_select 0, %s9, %s7
  $region1: #{convkb_forward_pallas.1} parent=0
    #allocation2 [shape = 'u8[2048]{0}', space=smem, size = 0x800, scoped, tag = 'input window, operand 0, single buffered']
    #allocation3 [shape = 's32[2]{0}', space=sflag, size = 0x8, scoped, tag = 'scoped memory for convkb_forward_pallas.1']
    #allocation4 [shape = 'u8[512]{0}', space=smem, size = 0x200, scoped, tag = 'input window, operand 1, single buffered']
    #allocation5 [shape = 's32[1]{0}', space=sflag, size = 0x4, scoped, tag = 'scoped memory for convkb_forward_pallas.1']
    %11 = vsyncpa [#allocation3], 0
    %12 = vsyncpa [#allocation5], 0
    loop: start=0, step=1, limit=4
    $region2: #{convkb_forward_pallas.1} parent=1 // loop_pre_header
      _
    $region3: #{convkb_forward_pallas.1} parent=1 // loop_header
      %s14 = sphi 0, %s18
      %p15 = scmp.ge.s32.totalorder %s14, 4
      %s22 = sphi 0, %s22
      %s24 = sphi 0, %s22
      %s25 = sphi 0, %s24
      %s39 = sphi 0, %s25
      %s43 = sphi 0, %s43
      %s45 = sphi 0, %s43
      %s46 = sphi 0, %s45
      %s60 = sphi 0, %s46
      %s64 = sphi 0, %s64
      %s66 = sphi 0, %s64
      %s67 = sphi 0, %s66
      %s81 = sphi 0, %s67
      %s87 = sphi 0, %s89
      %s90 = sphi 0, %s87
      %s91 = sphi 0, %s90
      %s107 = sphi 0, %s91
      %s113 = sphi 0, %s115
      %s116 = sphi 0, %s113
      %s117 = sphi 0, %s116
      %s133 = sphi 0, %s117
      %s139 = sphi 0, %s141
      %s142 = sphi 0, %s139
      %s143 = sphi 0, %s142
      %s159 = sphi 0, %s143
      %s165 = sphi 0, %s167
      %s168 = sphi 0, %s165
      %s169 = sphi 0, %s168
      %s185 = sphi 0, %s169
    $region4: #{convkb_forward_pallas.1} parent=1 // loop_header_branch
      %17 = sbr.rel (%p15) target = $region8
    $region5: #{convkb_forward_pallas.1} parent=1 // loop_body
      %s19 = ssub.s32 %s14, 1
      %s20 = ssub.s32 %s14, 2
      %s21 = sadd.s32 %s14, 1
      %s23 = sadd.s32 %s22, 1
      %p26 = scmp.eq.s32.totalorder %s14, 1
      %p27 = scmp.ne.s32.totalorder %s22, %s24
      %p28 = scmp.eq.s32.totalorder %s14, 0
      %p29 = por %p27, %p28
      %p30 = scmp.ne.s32.totalorder %s22, %s24
      %p31 = scmp.eq.s32.totalorder %s19, 1
      %p32 = por %p30, %p31
      %p33 = scmp.ne.s32.totalorder %s24, %s25
      %p34 = scmp.eq.s32.totalorder %s19, 0
      %p35 = por %p33, %p34
      %p36 = scmp.ne.s32.totalorder %s24, %s25
      %p37 = scmp.eq.s32.totalorder %s20, 1
      %p38 = por %p36, %p37
      %p40 = scmp.ne.s32.totalorder %s25, %s39
      %p41 = scmp.eq.s32.totalorder %s20, 0
      %p42 = por %p40, %p41
      %s44 = sadd.s32 %s43, 1
      %p47 = scmp.eq.s32.totalorder %s14, 1
      %p48 = scmp.ne.s32.totalorder %s43, %s45
      %p49 = scmp.eq.s32.totalorder %s14, 0
      %p50 = por %p48, %p49
      %p51 = scmp.ne.s32.totalorder %s43, %s45
      %p52 = scmp.eq.s32.totalorder %s19, 1
      %p53 = por %p51, %p52
      %p54 = scmp.ne.s32.totalorder %s45, %s46
      %p55 = scmp.eq.s32.totalorder %s19, 0
      %p56 = por %p54, %p55
      %p57 = scmp.ne.s32.totalorder %s45, %s46
      %p58 = scmp.eq.s32.totalorder %s20, 1
      %p59 = por %p57, %p58
      %p61 = scmp.ne.s32.totalorder %s46, %s60
      %p62 = scmp.eq.s32.totalorder %s20, 0
      %p63 = por %p61, %p62
      %s65 = sadd.s32 %s64, 1
      %p68 = scmp.eq.s32.totalorder %s14, 1
      %p69 = scmp.ne.s32.totalorder %s64, %s66
      %p70 = scmp.eq.s32.totalorder %s14, 0
      %p71 = por %p69, %p70
      %p72 = scmp.ne.s32.totalorder %s64, %s66
      %p73 = scmp.eq.s32.totalorder %s19, 1
      %p74 = por %p72, %p73
      %p75 = scmp.ne.s32.totalorder %s66, %s67
      %p76 = scmp.eq.s32.totalorder %s19, 0
      %p77 = por %p75, %p76
      %p78 = scmp.ne.s32.totalorder %s66, %s67
      %p79 = scmp.eq.s32.totalorder %s20, 1
      %p80 = por %p78, %p79
      %p82 = scmp.ne.s32.totalorder %s67, %s81
      %p83 = scmp.eq.s32.totalorder %s20, 0
      %p84 = por %p82, %p83
      %s85 = ssub.s32 %s14, %s21
      %p86 = scmp.eq.s32.totalorder %s85, 0
      %s88 = sadd.s32 %s87, 1
      %s89 = scalar_select %p86, %s87, %s88
      %p92 = pneg %p86
      %p93 = scmp.eq.s32.totalorder %s14, 1
      %p94 = por %p92, %p93
      %p95 = scmp.ne.s32.totalorder %s87, %s90
      %p96 = scmp.eq.s32.totalorder %s14, 0
      %p97 = por %p95, %p96
      %p98 = scmp.ne.s32.totalorder %s87, %s90
      %p99 = scmp.eq.s32.totalorder %s19, 1
      %p100 = por %p98, %p99
      %p101 = scmp.ne.s32.totalorder %s90, %s91
      %p102 = scmp.eq.s32.totalorder %s19, 0
      %p103 = por %p101, %p102
      %p104 = scmp.ne.s32.totalorder %s90, %s91
      %p105 = scmp.eq.s32.totalorder %s20, 1
      %p106 = por %p104, %p105
      %p108 = scmp.ne.s32.totalorder %s91, %s107
      %p109 = scmp.eq.s32.totalorder %s20, 0
      %p110 = por %p108, %p109
      %s111 = ssub.s32 %s14, %s21
      %p112 = scmp.eq.s32.totalorder %s111, 0
      %s114 = sadd.s32 %s113, 1
      %s115 = scalar_select %p112, %s113, %s114
      %p118 = pneg %p112
      %p119 = scmp.eq.s32.totalorder %s14, 1
      %p120 = por %p118, %p119
      %p121 = scmp.ne.s32.totalorder %s113, %s116
      %p122 = scmp.eq.s32.totalorder %s14, 0
      %p123 = por %p121, %p122
      %p124 = scmp.ne.s32.totalorder %s113, %s116
      %p125 = scmp.eq.s32.totalorder %s19, 1
      %p126 = por %p124, %p125
      %p127 = scmp.ne.s32.totalorder %s116, %s117
      %p128 = scmp.eq.s32.totalorder %s19, 0
      %p129 = por %p127, %p128
      %p130 = scmp.ne.s32.totalorder %s116, %s117
      %p131 = scmp.eq.s32.totalorder %s20, 1
      %p132 = por %p130, %p131
      %p134 = scmp.ne.s32.totalorder %s117, %s133
      %p135 = scmp.eq.s32.totalorder %s20, 0
      %p136 = por %p134, %p135
      %s137 = ssub.s32 %s14, %s21
      %p138 = scmp.eq.s32.totalorder %s137, 0
      %s140 = sadd.s32 %s139, 1
      %s141 = scalar_select %p138, %s139, %s140
      %p144 = pneg %p138
      %p145 = scmp.eq.s32.totalorder %s14, 1
      %p146 = por %p144, %p145
      %p147 = scmp.ne.s32.totalorder %s139, %s142
      %p148 = scmp.eq.s32.totalorder %s14, 0
      %p149 = por %p147, %p148
      %p150 = scmp.ne.s32.totalorder %s139, %s142
      %p151 = scmp.eq.s32.totalorder %s19, 1
      %p152 = por %p150, %p151
      %p153 = scmp.ne.s32.totalorder %s142, %s143
      %p154 = scmp.eq.s32.totalorder %s19, 0
      %p155 = por %p153, %p154
      %p156 = scmp.ne.s32.totalorder %s142, %s143
      %p157 = scmp.eq.s32.totalorder %s20, 1
      %p158 = por %p156, %p157
      %p160 = scmp.ne.s32.totalorder %s143, %s159
      %p161 = scmp.eq.s32.totalorder %s20, 0
      %p162 = por %p160, %p161
      %s163 = ssub.s32 %s14, %s21
      %p164 = scmp.eq.s32.totalorder %s163, 0
      %s166 = sadd.s32 %s165, 1
      %s167 = scalar_select %p164, %s165, %s166
      %p170 = pneg %p164
      %p171 = scmp.eq.s32.totalorder %s14, 1
      %p172 = por %p170, %p171
      %p173 = scmp.ne.s32.totalorder %s165, %s168
      %p174 = scmp.eq.s32.totalorder %s14, 0
      %p175 = por %p173, %p174
      %p176 = scmp.ne.s32.totalorder %s165, %s168
      %p177 = scmp.eq.s32.totalorder %s19, 1
      %p178 = por %p176, %p177
      %p179 = scmp.ne.s32.totalorder %s168, %s169
      %p180 = scmp.eq.s32.totalorder %s19, 0
      %p181 = por %p179, %p180
      %p182 = scmp.ne.s32.totalorder %s168, %s169
      %p183 = scmp.eq.s32.totalorder %s20, 1
      %p184 = por %p182, %p183
      %p186 = scmp.ne.s32.totalorder %s169, %s185
      %p187 = scmp.eq.s32.totalorder %s20, 0
      %p188 = por %p186, %p187
      %p189 = scmp.le.s32.totalorder 1, %s14
      %p190 = scmp.lt.s32.totalorder %s14, 3
      %p191 = pnand %p189, %p190
      %p192 = pneg %p191
      // Predicated region
      $region9: #{convkb_forward_pallas.1} parent=5 // pred_check
        _
      $region10: #{convkb_forward_pallas.1} parent=5 // pred_check_branch
        %194 = sbr.rel (%p191) target = $region12
      $region11: #{convkb_forward_pallas.1} parent=5 // pred_region
        %s195 = ssub.s32 %s14, 1
        // Predicated region
        $region13: #{convkb_forward_pallas.1} parent=11 // pred_check
          %p196 = pneg %p35
        $region14: #{convkb_forward_pallas.1} parent=11 // pred_check_branch
          %198 = sbr.rel (%p196) target = $region16
        $region15: #{convkb_forward_pallas.1} parent=11 // pred_region
          %s200 = ssub.s32 64, 64
          %201 = vsyncadd [#allocation3], %s200
          %s203 = sshll.u32 %s0, 4
          %s204 = int_to_ptr.vmem [resolvable:$true] %s203
          %206 = dma.vmem_to_smem %s204, 64, [#allocation2], [#allocation3]
        $region16: #{convkb_forward_pallas.1} parent=11 // pred_fallthru
          _
        // Predicated region
        $region17: #{convkb_forward_pallas.1} parent=11 // pred_check
          %p207 = pneg %p56
        $region18: #{convkb_forward_pallas.1} parent=11 // pred_check_branch
          %209 = sbr.rel (%p207) target = $region20
        $region19: #{convkb_forward_pallas.1} parent=11 // pred_region
          %s211 = ssub.s32 16, 16
          %212 = vsyncadd [#allocation5], %s211
          %s214 = sshll.u32 %s1, 4
          %s215 = int_to_ptr.vmem [resolvable:$true] %s214
          %217 = dma.vmem_to_smem %s215, 16, [#allocation4], [#allocation5]
        $region20: #{convkb_forward_pallas.1} parent=11 // pred_fallthru
          _
        // Predicated region
        $region21: #{convkb_forward_pallas.1} parent=11 // pred_check
          %p218 = pneg %p77
        $region22: #{convkb_forward_pallas.1} parent=11 // pred_check_branch
          %220 = sbr.rel (%p218) target = $region24
        $region23: #{convkb_forward_pallas.1} parent=11 // pred_region
          _
        $region24: #{convkb_forward_pallas.1} parent=11 // pred_fallthru
          _
      $region12: #{convkb_forward_pallas.1} parent=5 // pred_fallthru
        _
      %p221 = scmp.lt.s32.totalorder %s14, 2
      // Predicated region
      $region25: #{convkb_forward_pallas.1} parent=5 // pred_check
        %p222 = pneg %p221
      $region26: #{convkb_forward_pallas.1} parent=5 // pred_check_branch
        %224 = sbr.rel (%p222) target = $region28
      $region27: #{convkb_forward_pallas.1} parent=5 // pred_region
        // Predicated region
        $region29: #{convkb_forward_pallas.1} parent=27 // pred_check
          %p225 = pneg %p97
        $region30: #{convkb_forward_pallas.1} parent=27 // pred_check_branch
          %227 = sbr.rel (%p225) target = $region32
        $region31: #{convkb_forward_pallas.1} parent=27 // pred_region
          %p228 = scmp.lt.s32.totalorder %s14, 1
          %s229 = scalar_select %p228, %s14, 1
          %s230 = smul.addr %s229, 8
          %s231 = scalar_lea.vmem %s3, %s230
        $region32: #{convkb_forward_pallas.1} parent=27 // pred_fallthru
          _
        // Predicated region
        $region33: #{convkb_forward_pallas.1} parent=27 // pred_check
          %p232 = pneg %p123
        $region34: #{convkb_forward_pallas.1} parent=27 // pred_check_branch
          %234 = sbr.rel (%p232) target = $region36
        $region35: #{convkb_forward_pallas.1} parent=27 // pred_region
          %p235 = scmp.lt.s32.totalorder %s14, 1
          %s236 = scalar_select %p235, %s14, 1
          %s237 = smul.addr %s236, 8
          %s238 = scalar_lea.vmem %s4, %s237
        $region36: #{convkb_forward_pallas.1} parent=27 // pred_fallthru
          _
        // Predicated region
        $region37: #{convkb_forward_pallas.1} parent=27 // pred_check
          %p239 = pneg %p149
        $region38: #{convkb_forward_pallas.1} parent=27 // pred_check_branch
          %241 = sbr.rel (%p239) target = $region40
        $region39: #{convkb_forward_pallas.1} parent=27 // pred_region
          %p242 = scmp.lt.s32.totalorder %s14, 1
          %s243 = scalar_select %p242, %s14, 1
          %s244 = smul.addr %s243, 8
          %s245 = scalar_lea.vmem %s5, %s244
        $region40: #{convkb_forward_pallas.1} parent=27 // pred_fallthru
          _
      $region28: #{convkb_forward_pallas.1} parent=5 // pred_fallthru
        _
      %p246 = scmp.le.s32.totalorder 1, %s14
      %p247 = scmp.lt.s32.totalorder %s14, 3
      %p248 = pnand %p246, %p247
      %p249 = pneg %p248
      // Predicated region
      $region41: #{convkb_forward_pallas.1} parent=5 // pred_check
        _
      $region42: #{convkb_forward_pallas.1} parent=5 // pred_check_branch
        %251 = sbr.rel (%p248) target = $region44
      $region43: #{convkb_forward_pallas.1} parent=5 // pred_region
        %s252 = ssub.s32 %s14, 1
        // Predicated region
        $region45: #{convkb_forward_pallas.1} parent=43 // pred_check
          %p253 = pneg %p35
        $region46: #{convkb_forward_pallas.1} parent=43 // pred_check_branch
          %255 = sbr.rel (%p253) target = $region48
        $region47: #{convkb_forward_pallas.1} parent=43 // pred_region
          %256 = dma.done [#allocation3], 64
        $region48: #{convkb_forward_pallas.1} parent=43 // pred_fallthru
          _
        // Predicated region
        $region49: #{convkb_forward_pallas.1} parent=43 // pred_check
          %p257 = pneg %p56
        $region50: #{convkb_forward_pallas.1} parent=43 // pred_check_branch
          %259 = sbr.rel (%p257) target = $region52
        $region51: #{convkb_forward_pallas.1} parent=43 // pred_region
          %260 = dma.done [#allocation5], 16
        $region52: #{convkb_forward_pallas.1} parent=43 // pred_fallthru
          _
        %261 = sfence
        %p262 = pneg %p35
        %p263 = pneg %p32
        %p264 = pneg %p56
        %p265 = pneg %p53
        %p266 = pneg %p77
        %p267 = pneg %p74
        %p268 = scmp.lt.s32.totalorder %s19, 1
        %s269 = scalar_select %p268, %s19, 1
        %s270 = smul.addr %s269, 8
        %s271 = scalar_lea.vmem %s3, %s270
        %p272 = pneg %p103
        %p273 = pneg %p100
        %p274 = scmp.lt.s32.totalorder %s19, 1
        %s275 = scalar_select %p274, %s19, 1
        %s276 = smul.addr %s275, 8
        %s277 = scalar_lea.vmem %s4, %s276
        %p278 = pneg %p129
        %p279 = pneg %p126
        %p280 = scmp.lt.s32.totalorder %s19, 1
        %s281 = scalar_select %p280, %s19, 1
        %s282 = smul.addr %s281, 8
        %s283 = scalar_lea.vmem %s5, %s282
        %p284 = pneg %p155
        %p285 = pneg %p152
        %p286 = pneg %p181
        %p287 = pneg %p178
        %p288 = scmp.lt.s32.totalorder %s19, 1
        %s289 = scalar_select %p288, %s19, 1
        %s290 = smul.addr %s289, 8
        %s291 = scalar_lea.vmem %s6, %s290
        %p292 = scmp.lt.s32.totalorder %s19, 1
        %s293 = scalar_select %p292, %s19, 1
        %s294 = smul.addr %s293, 8
        %s295 = scalar_lea.vmem %s3, %s294
        %p296 = scmp.lt.s32.totalorder %s19, 1
        %s297 = scalar_select %p296, %s19, 1
        %s298 = smul.addr %s297, 8
        %s299 = scalar_lea.vmem %s4, %s298
        %p300 = scmp.lt.s32.totalorder %s19, 1
        %s301 = scalar_select %p300, %s19, 1
        %s302 = smul.addr %s301, 8
        %s303 = scalar_lea.vmem %s5, %s302
        %p304 = scmp.lt.s32.totalorder %s19, 1
        %s305 = scalar_select %p304, %s19, 1
        %s306 = smul.addr %s305, 8
        %s307 = scalar_lea.vmem %s6, %s306
        %v308 = vld [vmem:[%s295] sm:$0xff]
        %v309 = vld [vmem:[%s299] sm:$0xff]
        %v310 = vld [vmem:[%s303] sm:$0xff]
        %v311 = vld [vmem:[%s2] sm:$0xff]
        %v312 = vld [vmem:[%s2 + $0x8] sm:$0xff]
        %v313 = vld [vmem:[%s2 + $0x10] sm:$0xff]
        %v314 = vld [vmem:[%s2 + $0x18] sm:$0xff]
        %s315 = sld [smem:[#allocation2]]
        %v316 = vstv %s315
        %v317 = vmul.f32 %v316, %v308
        %s318 = sld [smem:[#allocation2 + $0x80]]
        %v319 = vstv %s318
        %v320 = vmul.f32 %v319, %v309
        %v321 = vadd.f32 %v317, %v320
        %s322 = sld [smem:[#allocation2 + $0x100]]
        %v323 = vstv %s322
        %v324 = vmul.f32 %v323, %v310
        %v325 = vadd.f32 %v321, %v324
        %s326 = sld [smem:[#allocation4]]
        %v327 = vstv %s326
        %v328 = vadd.f32 %v325, %v327
        %v329 = vmax.f32 %v328, 0.0
        %v330 = vlaneseq
        %v331 = vshrl.u32 %v330, 7
        %v332 = vsub.s32 0, %v331
        %v333 = vrot.slane %v311, %v332
        %v334 = vmul.f32 %v329, %v333
        %v335 = vadd.f32 %v334, 0.0
        %s336 = sld [smem:[#allocation2 + $0x1]]
        %v337 = vstv %s336
        %v338 = vmul.f32 %v337, %v308
        %s339 = sld [smem:[#allocation2 + $0x81]]
        %v340 = vstv %s339
        %v341 = vmul.f32 %v340, %v309
        %v342 = vadd.f32 %v338, %v341
        %s343 = sld [smem:[#allocation2 + $0x101]]
        %v344 = vstv %s343
        %v345 = vmul.f32 %v344, %v310
        %v346 = vadd.f32 %v342, %v345
        %s347 = sld [smem:[#allocation4 + $0x1]]
        %v348 = vstv %s347
        %v349 = vadd.f32 %v346, %v348
        %v350 = vmax.f32 %v349, 0.0
        %v351 = vlaneseq
        %v352 = vshrl.u32 %v351, 7
        %v353 = vsub.s32 1, %v352
        %v354 = vrot.slane %v311, %v353
        %v355 = vmul.f32 %v350, %v354
        %v356 = vadd.f32 %v335, %v355
        %s357 = sld [smem:[#allocation2 + $0x2]]
        %v358 = vstv %s357
        %v359 = vmul.f32 %v358, %v308
        %s360 = sld [smem:[#allocation2 + $0x82]]
        %v361 = vstv %s360
        %v362 = vmul.f32 %v361, %v309
        %v363 = vadd.f32 %v359, %v362
        %s364 = sld [smem:[#allocation2 + $0x102]]
        %v365 = vstv %s364
        %v366 = vmul.f32 %v365, %v310
        %v367 = vadd.f32 %v363, %v366
        %s368 = sld [smem:[#allocation4 + $0x2]]
        %v369 = vstv %s368
        %v370 = vadd.f32 %v367, %v369
        %v371 = vmax.f32 %v370, 0.0
        %v372 = vlaneseq
        %v373 = vshrl.u32 %v372, 7
        %v374 = vsub.s32 2, %v373
        %v375 = vrot.slane %v311, %v374
        %v376 = vmul.f32 %v371, %v375
        %v377 = vadd.f32 %v356, %v376
        %s378 = sld [smem:[#allocation2 + $0x3]]
        %v379 = vstv %s378
        %v380 = vmul.f32 %v379, %v308
        %s381 = sld [smem:[#allocation2 + $0x83]]
        %v382 = vstv %s381
        %v383 = vmul.f32 %v382, %v309
        %v384 = vadd.f32 %v380, %v383
        %s385 = sld [smem:[#allocation2 + $0x103]]
        %v386 = vstv %s385
        %v387 = vmul.f32 %v386, %v310
        %v388 = vadd.f32 %v384, %v387
        %s389 = sld [smem:[#allocation4 + $0x3]]
        %v390 = vstv %s389
        %v391 = vadd.f32 %v388, %v390
        %v392 = vmax.f32 %v391, 0.0
        %v393 = vlaneseq
        %v394 = vshrl.u32 %v393, 7
        %v395 = vsub.s32 3, %v394
        %v396 = vrot.slane %v311, %v395
        %v397 = vmul.f32 %v392, %v396
        %v398 = vadd.f32 %v377, %v397
        %s399 = sld [smem:[#allocation2 + $0x4]]
        %v400 = vstv %s399
        %v401 = vmul.f32 %v400, %v308
        %s402 = sld [smem:[#allocation2 + $0x84]]
        %v403 = vstv %s402
        %v404 = vmul.f32 %v403, %v309
        %v405 = vadd.f32 %v401, %v404
        %s406 = sld [smem:[#allocation2 + $0x104]]
        %v407 = vstv %s406
        %v408 = vmul.f32 %v407, %v310
        %v409 = vadd.f32 %v405, %v408
        %s410 = sld [smem:[#allocation4 + $0x4]]
        %v411 = vstv %s410
        %v412 = vadd.f32 %v409, %v411
        %v413 = vmax.f32 %v412, 0.0
        %v414 = vlaneseq
        %v415 = vshrl.u32 %v414, 7
        %v416 = vsub.s32 4, %v415
        %v417 = vrot.slane %v311, %v416
        %v418 = vmul.f32 %v413, %v417
        %v419 = vadd.f32 %v398, %v418
        %s420 = sld [smem:[#allocation2 + $0x5]]
        %v421 = vstv %s420
        %v422 = vmul.f32 %v421, %v308
        %s423 = sld [smem:[#allocation2 + $0x85]]
        %v424 = vstv %s423
        %v425 = vmul.f32 %v424, %v309
        %v426 = vadd.f32 %v422, %v425
        %s427 = sld [smem:[#allocation2 + $0x105]]
        %v428 = vstv %s427
        %v429 = vmul.f32 %v428, %v310
        %v430 = vadd.f32 %v426, %v429
        %s431 = sld [smem:[#allocation4 + $0x5]]
        %v432 = vstv %s431
        %v433 = vadd.f32 %v430, %v432
        %v434 = vmax.f32 %v433, 0.0
        %v435 = vlaneseq
        %v436 = vshrl.u32 %v435, 7
        %v437 = vsub.s32 5, %v436
        %v438 = vrot.slane %v311, %v437
        %v439 = vmul.f32 %v434, %v438
        %v440 = vadd.f32 %v419, %v439
        %s441 = sld [smem:[#allocation2 + $0x6]]
        %v442 = vstv %s441
        %v443 = vmul.f32 %v442, %v308
        %s444 = sld [smem:[#allocation2 + $0x86]]
        %v445 = vstv %s444
        %v446 = vmul.f32 %v445, %v309
        %v447 = vadd.f32 %v443, %v446
        %s448 = sld [smem:[#allocation2 + $0x106]]
        %v449 = vstv %s448
        %v450 = vmul.f32 %v449, %v310
        %v451 = vadd.f32 %v447, %v450
        %s452 = sld [smem:[#allocation4 + $0x6]]
        %v453 = vstv %s452
        %v454 = vadd.f32 %v451, %v453
        %v455 = vmax.f32 %v454, 0.0
        %v456 = vlaneseq
        %v457 = vshrl.u32 %v456, 7
        %v458 = vsub.s32 6, %v457
        %v459 = vrot.slane %v311, %v458
        %v460 = vmul.f32 %v455, %v459
        %v461 = vadd.f32 %v440, %v460
        %s462 = sld [smem:[#allocation2 + $0x7]]
        %v463 = vstv %s462
        %v464 = vmul.f32 %v463, %v308
        %s465 = sld [smem:[#allocation2 + $0x87]]
        %v466 = vstv %s465
        %v467 = vmul.f32 %v466, %v309
        %v468 = vadd.f32 %v464, %v467
        %s469 = sld [smem:[#allocation2 + $0x107]]
        %v470 = vstv %s469
        %v471 = vmul.f32 %v470, %v310
        %v472 = vadd.f32 %v468, %v471
        %s473 = sld [smem:[#allocation4 + $0x7]]
        %v474 = vstv %s473
        %v475 = vadd.f32 %v472, %v474
        %v476 = vmax.f32 %v475, 0.0
        %v477 = vlaneseq
        %v478 = vshrl.u32 %v477, 7
        %v479 = vsub.s32 7, %v478
        %v480 = vrot.slane %v311, %v479
        %v481 = vmul.f32 %v476, %v480
        %v482 = vadd.f32 %v461, %v481
        %s483 = sld [smem:[#allocation2 + $0x8]]
        %v484 = vstv %s483
        %v485 = vmul.f32 %v484, %v308
        %s486 = sld [smem:[#allocation2 + $0x88]]
        %v487 = vstv %s486
        %v488 = vmul.f32 %v487, %v309
        %v489 = vadd.f32 %v485, %v488
        %s490 = sld [smem:[#allocation2 + $0x108]]
        %v491 = vstv %s490
        %v492 = vmul.f32 %v491, %v310
        %v493 = vadd.f32 %v489, %v492
        %s494 = sld [smem:[#allocation4 + $0x8]]
        %v495 = vstv %s494
        %v496 = vadd.f32 %v493, %v495
        %v497 = vmax.f32 %v496, 0.0
        %v498 = vlaneseq
        %v499 = vshrl.u32 %v498, 7
        %v500 = vsub.s32 0, %v499
        %v501 = vrot.slane %v312, %v500
        %v502 = vmul.f32 %v497, %v501
        %v503 = vadd.f32 %v482, %v502
        %s504 = sld [smem:[#allocation2 + $0x9]]
        %v505 = vstv %s504
        %v506 = vmul.f32 %v505, %v308
        %s507 = sld [smem:[#allocation2 + $0x89]]
        %v508 = vstv %s507
        %v509 = vmul.f32 %v508, %v309
        %v510 = vadd.f32 %v506, %v509
        %s511 = sld [smem:[#allocation2 + $0x109]]
        %v512 = vstv %s511
        %v513 = vmul.f32 %v512, %v310
        %v514 = vadd.f32 %v510, %v513
        %s515 = sld [smem:[#allocation4 + $0x9]]
        %v516 = vstv %s515
        %v517 = vadd.f32 %v514, %v516
        %v518 = vmax.f32 %v517, 0.0
        %v519 = vlaneseq
        %v520 = vshrl.u32 %v519, 7
        %v521 = vsub.s32 1, %v520
        %v522 = vrot.slane %v312, %v521
        %v523 = vmul.f32 %v518, %v522
        %v524 = vadd.f32 %v503, %v523
        %s525 = sld [smem:[#allocation2 + $0xa]]
        %v526 = vstv %s525
        %v527 = vmul.f32 %v526, %v308
        %s528 = sld [smem:[#allocation2 + $0x8a]]
        %v529 = vstv %s528
        %v530 = vmul.f32 %v529, %v309
        %v531 = vadd.f32 %v527, %v530
        %s532 = sld [smem:[#allocation2 + $0x10a]]
        %v533 = vstv %s532
        %v534 = vmul.f32 %v533, %v310
        %v535 = vadd.f32 %v531, %v534
        %s536 = sld [smem:[#allocation4 + $0xa]]
        %v537 = vstv %s536
        %v538 = vadd.f32 %v535, %v537
        %v539 = vmax.f32 %v538, 0.0
        %v540 = vlaneseq
        %v541 = vshrl.u32 %v540, 7
        %v542 = vsub.s32 2, %v541
        %v543 = vrot.slane %v312, %v542
        %v544 = vmul.f32 %v539, %v543
        %v545 = vadd.f32 %v524, %v544
        %s546 = sld [smem:[#allocation2 + $0xb]]
        %v547 = vstv %s546
        %v548 = vmul.f32 %v547, %v308
        %s549 = sld [smem:[#allocation2 + $0x8b]]
        %v550 = vstv %s549
        %v551 = vmul.f32 %v550, %v309
        %v552 = vadd.f32 %v548, %v551
        %s553 = sld [smem:[#allocation2 + $0x10b]]
        %v554 = vstv %s553
        %v555 = vmul.f32 %v554, %v310
        %v556 = vadd.f32 %v552, %v555
        %s557 = sld [smem:[#allocation4 + $0xb]]
        %v558 = vstv %s557
        %v559 = vadd.f32 %v556, %v558
        %v560 = vmax.f32 %v559, 0.0
        %v561 = vlaneseq
        %v562 = vshrl.u32 %v561, 7
        %v563 = vsub.s32 3, %v562
        %v564 = vrot.slane %v312, %v563
        %v565 = vmul.f32 %v560, %v564
        %v566 = vadd.f32 %v545, %v565
        %s567 = sld [smem:[#allocation2 + $0xc]]
        %v568 = vstv %s567
        %v569 = vmul.f32 %v568, %v308
        %s570 = sld [smem:[#allocation2 + $0x8c]]
        %v571 = vstv %s570
        %v572 = vmul.f32 %v571, %v309
        %v573 = vadd.f32 %v569, %v572
        %s574 = sld [smem:[#allocation2 + $0x10c]]
        %v575 = vstv %s574
        %v576 = vmul.f32 %v575, %v310
        %v577 = vadd.f32 %v573, %v576
        %s578 = sld [smem:[#allocation4 + $0xc]]
        %v579 = vstv %s578
        %v580 = vadd.f32 %v577, %v579
        %v581 = vmax.f32 %v580, 0.0
        %v582 = vlaneseq
        %v583 = vshrl.u32 %v582, 7
        %v584 = vsub.s32 4, %v583
        %v585 = vrot.slane %v312, %v584
        %v586 = vmul.f32 %v581, %v585
        %v587 = vadd.f32 %v566, %v586
        %s588 = sld [smem:[#allocation2 + $0xd]]
        %v589 = vstv %s588
        %v590 = vmul.f32 %v589, %v308
        %s591 = sld [smem:[#allocation2 + $0x8d]]
        %v592 = vstv %s591
        %v593 = vmul.f32 %v592, %v309
        %v594 = vadd.f32 %v590, %v593
        %s595 = sld [smem:[#allocation2 + $0x10d]]
        %v596 = vstv %s595
        %v597 = vmul.f32 %v596, %v310
        %v598 = vadd.f32 %v594, %v597
        %s599 = sld [smem:[#allocation4 + $0xd]]
        %v600 = vstv %s599
        %v601 = vadd.f32 %v598, %v600
        %v602 = vmax.f32 %v601, 0.0
        %v603 = vlaneseq
        %v604 = vshrl.u32 %v603, 7
        %v605 = vsub.s32 5, %v604
        %v606 = vrot.slane %v312, %v605
        %v607 = vmul.f32 %v602, %v606
        %v608 = vadd.f32 %v587, %v607
        %s609 = sld [smem:[#allocation2 + $0xe]]
        %v610 = vstv %s609
        %v611 = vmul.f32 %v610, %v308
        %s612 = sld [smem:[#allocation2 + $0x8e]]
        %v613 = vstv %s612
        %v614 = vmul.f32 %v613, %v309
        %v615 = vadd.f32 %v611, %v614
        %s616 = sld [smem:[#allocation2 + $0x10e]]
        %v617 = vstv %s616
        %v618 = vmul.f32 %v617, %v310
        %v619 = vadd.f32 %v615, %v618
        %s620 = sld [smem:[#allocation4 + $0xe]]
        %v621 = vstv %s620
        %v622 = vadd.f32 %v619, %v621
        %v623 = vmax.f32 %v622, 0.0
        %v624 = vlaneseq
        %v625 = vshrl.u32 %v624, 7
        %v626 = vsub.s32 6, %v625
        %v627 = vrot.slane %v312, %v626
        %v628 = vmul.f32 %v623, %v627
        %v629 = vadd.f32 %v608, %v628
        %s630 = sld [smem:[#allocation2 + $0xf]]
        %v631 = vstv %s630
        %v632 = vmul.f32 %v631, %v308
        %s633 = sld [smem:[#allocation2 + $0x8f]]
        %v634 = vstv %s633
        %v635 = vmul.f32 %v634, %v309
        %v636 = vadd.f32 %v632, %v635
        %s637 = sld [smem:[#allocation2 + $0x10f]]
        %v638 = vstv %s637
        %v639 = vmul.f32 %v638, %v310
        %v640 = vadd.f32 %v636, %v639
        %s641 = sld [smem:[#allocation4 + $0xf]]
        %v642 = vstv %s641
        %v643 = vadd.f32 %v640, %v642
        %v644 = vmax.f32 %v643, 0.0
        %v645 = vlaneseq
        %v646 = vshrl.u32 %v645, 7
        %v647 = vsub.s32 7, %v646
        %v648 = vrot.slane %v312, %v647
        %v649 = vmul.f32 %v644, %v648
        %v650 = vadd.f32 %v629, %v649
        %s651 = sld [smem:[#allocation2 + $0x10]]
        %v652 = vstv %s651
        %v653 = vmul.f32 %v652, %v308
        %s654 = sld [smem:[#allocation2 + $0x90]]
        %v655 = vstv %s654
        %v656 = vmul.f32 %v655, %v309
        %v657 = vadd.f32 %v653, %v656
        %s658 = sld [smem:[#allocation2 + $0x110]]
        %v659 = vstv %s658
        %v660 = vmul.f32 %v659, %v310
        %v661 = vadd.f32 %v657, %v660
        %s662 = sld [smem:[#allocation4 + $0x10]]
        %v663 = vstv %s662
        %v664 = vadd.f32 %v661, %v663
        %v665 = vmax.f32 %v664, 0.0
        %v666 = vlaneseq
        %v667 = vshrl.u32 %v666, 7
        %v668 = vsub.s32 0, %v667
        %v669 = vrot.slane %v313, %v668
        %v670 = vmul.f32 %v665, %v669
        %v671 = vadd.f32 %v650, %v670
        %s672 = sld [smem:[#allocation2 + $0x11]]
        %v673 = vstv %s672
        %v674 = vmul.f32 %v673, %v308
        %s675 = sld [smem:[#allocation2 + $0x91]]
        %v676 = vstv %s675
        %v677 = vmul.f32 %v676, %v309
        %v678 = vadd.f32 %v674, %v677
        %s679 = sld [smem:[#allocation2 + $0x111]]
        %v680 = vstv %s679
        %v681 = vmul.f32 %v680, %v310
        %v682 = vadd.f32 %v678, %v681
        %s683 = sld [smem:[#allocation4 + $0x11]]
        %v684 = vstv %s683
        %v685 = vadd.f32 %v682, %v684
        %v686 = vmax.f32 %v685, 0.0
        %v687 = vlaneseq
        %v688 = vshrl.u32 %v687, 7
        %v689 = vsub.s32 1, %v688
        %v690 = vrot.slane %v313, %v689
        %v691 = vmul.f32 %v686, %v690
        %v692 = vadd.f32 %v671, %v691
        %s693 = sld [smem:[#allocation2 + $0x12]]
        %v694 = vstv %s693
        %v695 = vmul.f32 %v694, %v308
        %s696 = sld [smem:[#allocation2 + $0x92]]
        %v697 = vstv %s696
        %v698 = vmul.f32 %v697, %v309
        %v699 = vadd.f32 %v695, %v698
        %s700 = sld [smem:[#allocation2 + $0x112]]
        %v701 = vstv %s700
        %v702 = vmul.f32 %v701, %v310
        %v703 = vadd.f32 %v699, %v702
        %s704 = sld [smem:[#allocation4 + $0x12]]
        %v705 = vstv %s704
        %v706 = vadd.f32 %v703, %v705
        %v707 = vmax.f32 %v706, 0.0
        %v708 = vlaneseq
        %v709 = vshrl.u32 %v708, 7
        %v710 = vsub.s32 2, %v709
        %v711 = vrot.slane %v313, %v710
        %v712 = vmul.f32 %v707, %v711
        %v713 = vadd.f32 %v692, %v712
        %s714 = sld [smem:[#allocation2 + $0x13]]
        %v715 = vstv %s714
        %v716 = vmul.f32 %v715, %v308
        %s717 = sld [smem:[#allocation2 + $0x93]]
        %v718 = vstv %s717
        %v719 = vmul.f32 %v718, %v309
        %v720 = vadd.f32 %v716, %v719
        %s721 = sld [smem:[#allocation2 + $0x113]]
        %v722 = vstv %s721
        %v723 = vmul.f32 %v722, %v310
        %v724 = vadd.f32 %v720, %v723
        %s725 = sld [smem:[#allocation4 + $0x13]]
        %v726 = vstv %s725
        %v727 = vadd.f32 %v724, %v726
        %v728 = vmax.f32 %v727, 0.0
        %v729 = vlaneseq
        %v730 = vshrl.u32 %v729, 7
        %v731 = vsub.s32 3, %v730
        %v732 = vrot.slane %v313, %v731
        %v733 = vmul.f32 %v728, %v732
        %v734 = vadd.f32 %v713, %v733
        %s735 = sld [smem:[#allocation2 + $0x14]]
        %v736 = vstv %s735
        %v737 = vmul.f32 %v736, %v308
        %s738 = sld [smem:[#allocation2 + $0x94]]
        %v739 = vstv %s738
        %v740 = vmul.f32 %v739, %v309
        %v741 = vadd.f32 %v737, %v740
        %s742 = sld [smem:[#allocation2 + $0x114]]
        %v743 = vstv %s742
        %v744 = vmul.f32 %v743, %v310
        %v745 = vadd.f32 %v741, %v744
        %s746 = sld [smem:[#allocation4 + $0x14]]
        %v747 = vstv %s746
        %v748 = vadd.f32 %v745, %v747
        %v749 = vmax.f32 %v748, 0.0
        %v750 = vlaneseq
        %v751 = vshrl.u32 %v750, 7
        %v752 = vsub.s32 4, %v751
        %v753 = vrot.slane %v313, %v752
        %v754 = vmul.f32 %v749, %v753
        %v755 = vadd.f32 %v734, %v754
        %s756 = sld [smem:[#allocation2 + $0x15]]
        %v757 = vstv %s756
        %v758 = vmul.f32 %v757, %v308
        %s759 = sld [smem:[#allocation2 + $0x95]]
        %v760 = vstv %s759
        %v761 = vmul.f32 %v760, %v309
        %v762 = vadd.f32 %v758, %v761
        %s763 = sld [smem:[#allocation2 + $0x115]]
        %v764 = vstv %s763
        %v765 = vmul.f32 %v764, %v310
        %v766 = vadd.f32 %v762, %v765
        %s767 = sld [smem:[#allocation4 + $0x15]]
        %v768 = vstv %s767
        %v769 = vadd.f32 %v766, %v768
        %v770 = vmax.f32 %v769, 0.0
        %v771 = vlaneseq
        %v772 = vshrl.u32 %v771, 7
        %v773 = vsub.s32 5, %v772
        %v774 = vrot.slane %v313, %v773
        %v775 = vmul.f32 %v770, %v774
        %v776 = vadd.f32 %v755, %v775
        %s777 = sld [smem:[#allocation2 + $0x16]]
        %v778 = vstv %s777
        %v779 = vmul.f32 %v778, %v308
        %s780 = sld [smem:[#allocation2 + $0x96]]
        %v781 = vstv %s780
        %v782 = vmul.f32 %v781, %v309
        %v783 = vadd.f32 %v779, %v782
        %s784 = sld [smem:[#allocation2 + $0x116]]
        %v785 = vstv %s784
        %v786 = vmul.f32 %v785, %v310
        %v787 = vadd.f32 %v783, %v786
        %s788 = sld [smem:[#allocation4 + $0x16]]
        %v789 = vstv %s788
        %v790 = vadd.f32 %v787, %v789
        %v791 = vmax.f32 %v790, 0.0
        %v792 = vlaneseq
        %v793 = vshrl.u32 %v792, 7
        %v794 = vsub.s32 6, %v793
        %v795 = vrot.slane %v313, %v794
        %v796 = vmul.f32 %v791, %v795
        %v797 = vadd.f32 %v776, %v796
        %s798 = sld [smem:[#allocation2 + $0x17]]
        %v799 = vstv %s798
        %v800 = vmul.f32 %v799, %v308
        %s801 = sld [smem:[#allocation2 + $0x97]]
        %v802 = vstv %s801
        %v803 = vmul.f32 %v802, %v309
        %v804 = vadd.f32 %v800, %v803
        %s805 = sld [smem:[#allocation2 + $0x117]]
        %v806 = vstv %s805
        %v807 = vmul.f32 %v806, %v310
        %v808 = vadd.f32 %v804, %v807
        %s809 = sld [smem:[#allocation4 + $0x17]]
        %v810 = vstv %s809
        %v811 = vadd.f32 %v808, %v810
        %v812 = vmax.f32 %v811, 0.0
        %v813 = vlaneseq
        %v814 = vshrl.u32 %v813, 7
        %v815 = vsub.s32 7, %v814
        %v816 = vrot.slane %v313, %v815
        %v817 = vmul.f32 %v812, %v816
        %v818 = vadd.f32 %v797, %v817
        %s819 = sld [smem:[#allocation2 + $0x18]]
        %v820 = vstv %s819
        %v821 = vmul.f32 %v820, %v308
        %s822 = sld [smem:[#allocation2 + $0x98]]
        %v823 = vstv %s822
        %v824 = vmul.f32 %v823, %v309
        %v825 = vadd.f32 %v821, %v824
        %s826 = sld [smem:[#allocation2 + $0x118]]
        %v827 = vstv %s826
        %v828 = vmul.f32 %v827, %v310
        %v829 = vadd.f32 %v825, %v828
        %s830 = sld [smem:[#allocation4 + $0x18]]
        %v831 = vstv %s830
        %v832 = vadd.f32 %v829, %v831
        %v833 = vmax.f32 %v832, 0.0
        %v834 = vlaneseq
        %v835 = vshrl.u32 %v834, 7
        %v836 = vsub.s32 0, %v835
        %v837 = vrot.slane %v314, %v836
        %v838 = vmul.f32 %v833, %v837
        %v839 = vadd.f32 %v818, %v838
        %s840 = sld [smem:[#allocation2 + $0x19]]
        %v841 = vstv %s840
        %v842 = vmul.f32 %v841, %v308
        %s843 = sld [smem:[#allocation2 + $0x99]]
        %v844 = vstv %s843
        %v845 = vmul.f32 %v844, %v309
        %v846 = vadd.f32 %v842, %v845
        %s847 = sld [smem:[#allocation2 + $0x119]]
        %v848 = vstv %s847
        %v849 = vmul.f32 %v848, %v310
        %v850 = vadd.f32 %v846, %v849
        %s851 = sld [smem:[#allocation4 + $0x19]]
        %v852 = vstv %s851
        %v853 = vadd.f32 %v850, %v852
        %v854 = vmax.f32 %v853, 0.0
        %v855 = vlaneseq
        %v856 = vshrl.u32 %v855, 7
        %v857 = vsub.s32 1, %v856
        %v858 = vrot.slane %v314, %v857
        %v859 = vmul.f32 %v854, %v858
        %v860 = vadd.f32 %v839, %v859
        %s861 = sld [smem:[#allocation2 + $0x1a]]
        %v862 = vstv %s861
        %v863 = vmul.f32 %v862, %v308
        %s864 = sld [smem:[#allocation2 + $0x9a]]
        %v865 = vstv %s864
        %v866 = vmul.f32 %v865, %v309
        %v867 = vadd.f32 %v863, %v866
        %s868 = sld [smem:[#allocation2 + $0x11a]]
        %v869 = vstv %s868
        %v870 = vmul.f32 %v869, %v310
        %v871 = vadd.f32 %v867, %v870
        %s872 = sld [smem:[#allocation4 + $0x1a]]
        %v873 = vstv %s872
        %v874 = vadd.f32 %v871, %v873
        %v875 = vmax.f32 %v874, 0.0
        %v876 = vlaneseq
        %v877 = vshrl.u32 %v876, 7
        %v878 = vsub.s32 2, %v877
        %v879 = vrot.slane %v314, %v878
        %v880 = vmul.f32 %v875, %v879
        %v881 = vadd.f32 %v860, %v880
        %s882 = sld [smem:[#allocation2 + $0x1b]]
        %v883 = vstv %s882
        %v884 = vmul.f32 %v883, %v308
        %s885 = sld [smem:[#allocation2 + $0x9b]]
        %v886 = vstv %s885
        %v887 = vmul.f32 %v886, %v309
        %v888 = vadd.f32 %v884, %v887
        %s889 = sld [smem:[#allocation2 + $0x11b]]
        %v890 = vstv %s889
        %v891 = vmul.f32 %v890, %v310
        %v892 = vadd.f32 %v888, %v891
        %s893 = sld [smem:[#allocation4 + $0x1b]]
        %v894 = vstv %s893
        %v895 = vadd.f32 %v892, %v894
        %v896 = vmax.f32 %v895, 0.0
        %v897 = vlaneseq
        %v898 = vshrl.u32 %v897, 7
        %v899 = vsub.s32 3, %v898
        %v900 = vrot.slane %v314, %v899
        %v901 = vmul.f32 %v896, %v900
        %v902 = vadd.f32 %v881, %v901
        %s903 = sld [smem:[#allocation2 + $0x1c]]
        %v904 = vstv %s903
        %v905 = vmul.f32 %v904, %v308
        %s906 = sld [smem:[#allocation2 + $0x9c]]
        %v907 = vstv %s906
        %v908 = vmul.f32 %v907, %v309
        %v909 = vadd.f32 %v905, %v908
        %s910 = sld [smem:[#allocation2 + $0x11c]]
        %v911 = vstv %s910
        %v912 = vmul.f32 %v911, %v310
        %v913 = vadd.f32 %v909, %v912
        %s914 = sld [smem:[#allocation4 + $0x1c]]
        %v915 = vstv %s914
        %v916 = vadd.f32 %v913, %v915
        %v917 = vmax.f32 %v916, 0.0
        %v918 = vlaneseq
        %v919 = vshrl.u32 %v918, 7
        %v920 = vsub.s32 4, %v919
        %v921 = vrot.slane %v314, %v920
        %v922 = vmul.f32 %v917, %v921
        %v923 = vadd.f32 %v902, %v922
        %s924 = sld [smem:[#allocation2 + $0x1d]]
        %v925 = vstv %s924
        %v926 = vmul.f32 %v925, %v308
        %s927 = sld [smem:[#allocation2 + $0x9d]]
        %v928 = vstv %s927
        %v929 = vmul.f32 %v928, %v309
        %v930 = vadd.f32 %v926, %v929
        %s931 = sld [smem:[#allocation2 + $0x11d]]
        %v932 = vstv %s931
        %v933 = vmul.f32 %v932, %v310
        %v934 = vadd.f32 %v930, %v933
        %s935 = sld [smem:[#allocation4 + $0x1d]]
        %v936 = vstv %s935
        %v937 = vadd.f32 %v934, %v936
        %v938 = vmax.f32 %v937, 0.0
        %v939 = vlaneseq
        %v940 = vshrl.u32 %v939, 7
        %v941 = vsub.s32 5, %v940
        %v942 = vrot.slane %v314, %v941
        %v943 = vmul.f32 %v938, %v942
        %v944 = vadd.f32 %v923, %v943
        %s945 = sld [smem:[#allocation2 + $0x1e]]
        %v946 = vstv %s945
        %v947 = vmul.f32 %v946, %v308
        %s948 = sld [smem:[#allocation2 + $0x9e]]
        %v949 = vstv %s948
        %v950 = vmul.f32 %v949, %v309
        %v951 = vadd.f32 %v947, %v950
        %s952 = sld [smem:[#allocation2 + $0x11e]]
        %v953 = vstv %s952
        %v954 = vmul.f32 %v953, %v310
        %v955 = vadd.f32 %v951, %v954
        %s956 = sld [smem:[#allocation4 + $0x1e]]
        %v957 = vstv %s956
        %v958 = vadd.f32 %v955, %v957
        %v959 = vmax.f32 %v958, 0.0
        %v960 = vlaneseq
        %v961 = vshrl.u32 %v960, 7
        %v962 = vsub.s32 6, %v961
        %v963 = vrot.slane %v314, %v962
        %v964 = vmul.f32 %v959, %v963
        %v965 = vadd.f32 %v944, %v964
        %s966 = sld [smem:[#allocation2 + $0x1f]]
        %v967 = vstv %s966
        %v968 = vmul.f32 %v967, %v308
        %s969 = sld [smem:[#allocation2 + $0x9f]]
        %v970 = vstv %s969
        %v971 = vmul.f32 %v970, %v309
        %v972 = vadd.f32 %v968, %v971
        %s973 = sld [smem:[#allocation2 + $0x11f]]
        %v974 = vstv %s973
        %v975 = vmul.f32 %v974, %v310
        %v976 = vadd.f32 %v972, %v975
        %s977 = sld [smem:[#allocation4 + $0x1f]]
        %v978 = vstv %s977
        %v979 = vadd.f32 %v976, %v978
        %v980 = vmax.f32 %v979, 0.0
        %v981 = vlaneseq
        %v982 = vshrl.u32 %v981, 7
        %v983 = vsub.s32 7, %v982
        %v984 = vrot.slane %v314, %v983
        %v985 = vmul.f32 %v980, %v984
        %v986 = vadd.f32 %v965, %v985
        %vm987 = vcmask 261120
        %v988 = vsel %vm987, %v986, 0.0
        %989 = vadd.xlane.f32.xlu0 %v988
        %v990 = vpop.xlane.xlu0 %989
        %v991 = vsub.f32 0.0, %v990
        %vm992 = vcmask 7168
        %993 = vst.msk [vmem:[%s307] sm:$0xff] %vm992, %v991
        %p994 = scmp.lt.s32.totalorder %s19, 1
        %s995 = scalar_select %p994, %s19, 1
        %s996 = smul.addr %s995, 8
        %s997 = scalar_lea.vmem %s6, %s996
        // Predicated region
        $region53: #{convkb_forward_pallas.1} parent=43 // pred_check
          %p998 = pneg %p178
        $region54: #{convkb_forward_pallas.1} parent=43 // pred_check_branch
          %1000 = sbr.rel (%p998) target = $region56
        $region55: #{convkb_forward_pallas.1} parent=43 // pred_region
          _
        $region56: #{convkb_forward_pallas.1} parent=43 // pred_fallthru
          _
      $region44: #{convkb_forward_pallas.1} parent=5 // pred_fallthru
        _
      %p1001 = scmp.le.s32.totalorder 2, %s14
      // Predicated region
      $region57: #{convkb_forward_pallas.1} parent=5 // pred_check
        %p1002 = pneg %p1001
      $region58: #{convkb_forward_pallas.1} parent=5 // pred_check_branch
        %1004 = sbr.rel (%p1002) target = $region60
      $region59: #{convkb_forward_pallas.1} parent=5 // pred_region
        %s1005 = ssub.s32 %s14, 2
        // Predicated region
        $region61: #{convkb_forward_pallas.1} parent=59 // pred_check
          %p1006 = pneg %p184
        $region62: #{convkb_forward_pallas.1} parent=59 // pred_check_branch
          %1008 = sbr.rel (%p1006) target = $region64
        $region63: #{convkb_forward_pallas.1} parent=59 // pred_region
          %p1009 = scmp.lt.s32.totalorder %s20, 1
          %s1010 = scalar_select %p1009, %s20, 1
          %s1011 = smul.addr %s1010, 8
          %s1012 = scalar_lea.vmem %s6, %s1011
        $region64: #{convkb_forward_pallas.1} parent=59 // pred_fallthru
          _
      $region60: #{convkb_forward_pallas.1} parent=5 // pred_fallthru
        _
    $region6: #{convkb_forward_pallas.1} parent=1 // loop_footer
      %s18 = sadd.s32 1, %s14
    $region7: #{convkb_forward_pallas.1} parent=1 // loop_footer_branch
      %13 = sbr.rel target = $region3
    $region8: #{convkb_forward_pallas.1} parent=1 // loop_exit
      _
    %1013 = vsyncpa [#allocation3], 1
    %s1014 = scalar_lea.sflag [#allocation3], 1
    %1015 = vsyncpa %s1014, 1
    %1016 = vsyncpa [#allocation5], 1

</llo_original>
